<compile_context>
chip_gen: v5e
topology: v5e:2x2
jax: 0.10.0
libtpu: 0.0.40
codegen_flags: <defaults>
</compile_context>

<pallas_src>
import functools

import numpy as np
import jax
import jax.numpy as jnp
from jax.experimental import pallas as pl
from jax.experimental.pallas import tpu as pltpu


# ----------------------------- anchor helpers (plain numpy glue) -------------
def generate_anchor_base(base_size=16, ratios=(0.5, 1, 2), anchor_scales=(8, 16, 32)):
    anchor_base = np.zeros((len(ratios) * len(anchor_scales), 4), dtype=np.float32)
    for i in range(len(ratios)):
        for j in range(len(anchor_scales)):
            h = base_size * anchor_scales[j] * np.sqrt(ratios[i])
            w = base_size * anchor_scales[j] * np.sqrt(1.0 / ratios[i])
            idx = i * len(anchor_scales) + j
            anchor_base[idx, 0] = -h / 2.0
            anchor_base[idx, 1] = -w / 2.0
            anchor_base[idx, 2] = h / 2.0
            anchor_base[idx, 3] = w / 2.0
    return anchor_base


def _enumerate_shifted_anchor(anchor_base, feat_stride, height, width):
    shift_x = np.arange(0, width * feat_stride, feat_stride)
    shift_y = np.arange(0, height * feat_stride, feat_stride)
    shift_x, shift_y = np.meshgrid(shift_x, shift_y)
    shift = np.stack(
        (shift_x.ravel(), shift_y.ravel(), shift_x.ravel(), shift_y.ravel()), axis=1
    )
    A = anchor_base.shape[0]
    K = shift.shape[0]
    anchor = anchor_base.reshape((1, A, 4)) + shift.reshape((K, 1, 4))
    return anchor.reshape((K * A, 4)).astype(np.float32)


def _vmem_capacity_bytes(default=64 << 20):
    """Best-effort VMEM capacity query (generation-aware tiling / limits)."""
    try:
        return int(getattr(pltpu.get_tpu_info(), "vmem_capacity_bytes", default))
    except Exception:
        return default


# ----------------------------- Pallas kernel ---------------------------------
def rpn_kernel(rows_ref,          # (row_tile, W+2, 3*Cin)  ky taps folded into channels
               w1_ref, b1_ref,    # (3, 3*Cin, Cmid), (1, Cmid)
               wh_ref, bh_ref,    # (Cmid, 128),      (1, 128)  fused [loc|sc|fg-bg] + pad
               out_ref,           # (row_tile*W, 128)
               *, row_tile, width, fg_lo, fg_hi):
    cin3 = rows_ref.shape[-1]
    m = row_tile * width

    # 3x3 conv: kx taps are three static W-shifted slices of the row tile,
    # accumulated as bf16 (m, 3*Cin) @ (3*Cin, Cmid) MXU matmuls with f32 acc.
    # TODO(synk): kx=1,2 slices start sublane-misaligned; if the Mosaic dump
    # shows relayout copies, do the matmul on the full W+2 width and shift in
    # the Cmid domain instead.
    acc = jnp.zeros((m, w1_ref.shape[-1]), jnp.float32)
    for kx in range(3):
        xk = rows_ref[:, kx:kx + width, :].reshape(m, cin3)
        acc = acc + jnp.dot(xk, w1_ref[kx], preferred_element_type=jnp.float32)
    hidden = jnp.maximum(acc + b1_ref[...], 0.0)               # conv1 bias + ReLU (f32)

    # fused heads: ONE lane-dense 128-wide matmul  [loc(4A) | score(2A) | fg-bg(A) | 0-pad]
    head = jnp.dot(hidden.astype(wh_ref.dtype), wh_ref[...],
                   preferred_element_type=jnp.float32) + bh_ref[...]

    # softmax([bg, fg])[1] == sigmoid(fg - bg): sigmoid only kept on fg-diff lanes
    col = jax.lax.broadcasted_iota(jnp.int32, head.shape, 1)
    out_ref[...] = jnp.where((col >= fg_lo) & (col < fg_hi),
                             jax.nn.sigmoid(head), head)


# ----------------------------- wrapper ----------------------------------------
def rpn_forward(x_nchw, params, feat_stride=16, compute_dtype=jnp.bfloat16,
                row_tile=None):
    n, cin, h, w = x_nchw.shape
    w1, b1 = params["w1"], params["b1"]            # (9*cin, cmid), (1, cmid)
    wloc, bloc = params["wloc"], params["bloc"]    # (cmid, 4A),    (1, 4A)
    wsc, bsc = params["wsc"], params["bsc"]        # (cmid, 2A),    (1, 2A)
    cmid = w1.shape[1]
    A = wloc.shape[1] // 4

    # ---- activation prep (glue): NHWC, pad 1, fold ky taps into channels.
    # Done in compute dtype (bf16 default) so the fold traffic is halved.
    x_nhwc = jnp.transpose(x_nchw, (0, 2, 3, 1)).astype(compute_dtype)
    xp = jnp.pad(x_nhwc, ((0, 0), (1, 1), (1, 1), (0, 0)))
    # TODO(synk): replace this 3x materialization with an in-kernel halo read
    # (memory_space=pl.ANY + manual double-buffered make_async_copy).
    rows = jnp.concatenate([xp[:, ky:ky + h, :, :] for ky in range(3)], axis=-1)
    rows = rows.reshape(n * h, w + 2, 3 * cin)     # feature rows are independent

    # ---- conv1 weights regrouped per-kx as (ky, cin)-major slabs ----
    w1_taps = jnp.transpose(w1.reshape(3, 3, cin, cmid), (1, 0, 2, 3))
    w1_taps = w1_taps.reshape(3, 3 * cin, cmid).astype(compute_dtype)
    b1f = b1.astype(jnp.float32)

    # ---- fused head weights: [loc | score | fg-bg], zero-padded to 128 lanes ----
    # NOTE: assumes (bg, fg) interleaved score channels, matching the PyTorch
    # view(n, -1, 2) semantics.
    wdiff = wsc[:, 1::2] - wsc[:, 0::2]
    bdiff = bsc[:, 1::2] - bsc[:, 0::2]
    n_head = 7 * A                                  # 4A + 2A + A
    head_pad = ((n_head + 127) // 128) * 128
    whead = jnp.zeros((cmid, head_pad), jnp.float32)
    whead = whead.at[:, :n_head].set(jnp.concatenate([wloc, wsc, wdiff], axis=1))
    whead = whead.astype(compute_dtype)
    bhead = jnp.zeros((1, head_pad), jnp.float32)
    bhead = bhead.at[:, :n_head].set(jnp.concatenate([bloc, bsc, bdiff], axis=1))

    itemsize = jnp.dtype(compute_dtype).itemsize
    vmem_cap = max(_vmem_capacity_bytes(), 64 << 20)

    # ---- row-tile selection: generation-aware activation-tile target, sublane-
    # aligned, preferring an even grid-step count (v7x has 2 TensorCores). ----
    total_rows = n * h
    if row_tile is None:
        act_target = (8 << 20) if vmem_cap >= (100 << 20) else (4 << 20)
        bytes_per_row = (w + 2) * 3 * cin * itemsize
        cand = max(8, (act_target // max(bytes_per_row, 1)) // 8 * 8)
        if cand >= total_rows:
            row_tile = total_rows                   # one fused grid step (toy sizes)
        else:
            row_tile = cand
            for delta in (0, 8, -8, 16, -16, 24, -24):
                rt = cand + delta
                if 8 <= rt < total_rows and pl.cdiv(total_rows, rt) % 2 == 0:
                    row_tile = rt                   # even #tiles -> both TCs busy
                    break
    else:
        row_tile = min(row_tile, total_rows)
        if row_tile < total_rows:
            row_tile = max(8, (row_tile // 8) * 8)  # keep tile*W a multiple of 8
    num_tiles = pl.cdiv(total_rows, row_tile)       # partial last tile is masked

    kernel = functools.partial(rpn_kernel, row_tile=row_tile, width=w,
                               fg_lo=6 * A, fg_hi=7 * A)

    # ---- VMEM budget (explicit, generation-aware) ----
    m = row_tile * w
    rows_blk = row_tile * (w + 2) * 3 * cin * itemsize
    weight_bytes = (w1_taps.size + whead.size) * itemsize + (b1f.size + bhead.size) * 4
    out_blk = m * head_pad * 4
    interm = m * (2 * cmid + 2 * head_pad) * 4

    def _call(single_buffer_weights):
        def wspec(shape):
            # Constant-index weight/bias blocks: single-buffer to avoid a
            # redundant second VMEM copy of the (potentially multi-MB) weights.
            if single_buffer_weights:
                return pl.BlockSpec(shape, lambda t: (0,) * len(shape),
                                    pipeline_mode=pl.Buffered(1))
            return pl.BlockSpec(shape, lambda t: (0,) * len(shape))

        needed = (2 * rows_blk
                  + (1 if single_buffer_weights else 2) * weight_bytes
                  + 2 * out_blk + interm + (4 << 20))
        vmem_limit = int(min(max(needed, 32 << 20), int(0.75 * vmem_cap), 100 << 20))

        return pl.pallas_call(
            kernel,
            out_shape=jax.ShapeDtypeStruct((total_rows * w, head_pad), jnp.float32),
            grid=(num_tiles,),
            in_specs=[
                # rows: double-buffered by default; bump to pl.Buffered(3) if
                # xprof shows the DMA exposed on v6e.
                pl.BlockSpec((row_tile, w + 2, 3 * cin), lambda t: (t, 0, 0)),
                wspec(w1_taps.shape),
                wspec(b1f.shape),
                wspec(whead.shape),
                wspec(bhead.shape),
            ],
            out_specs=pl.BlockSpec((row_tile * w, head_pad), lambda t: (t, 0)),
            compiler_params=pltpu.CompilerParams(
                dimension_semantics=("parallel",),
                vmem_limit_bytes=vmem_limit),
        )(rows, w1_taps, b1f, whead, bhead)

    try:
        out = _call(True)
    except Exception:
        # Fallback if this JAX build rejects Buffered(1) on an input spec.
        out = _call(False)

    out = out.reshape(n, h * w, head_pad)
    rpn_locs = out[..., : 4 * A].reshape(n, h * w * A, 4)
    rpn_scores = out[..., 4 * A: 6 * A].reshape(n, h * w * A, 2)
    rpn_fg_scores = out[..., 6 * A: 7 * A].reshape(n, h * w * A)

    anchor_base = generate_anchor_base()
    anchor = _enumerate_shifted_anchor(anchor_base, feat_stride, h, w)
    anchor = jnp.asarray(anchor, dtype=jnp.float32)[None]       # (1, h*w*A, 4)

    # TODO(synk): proposal_creator (loc->box decode, clamp, size filter, sort,
    # NMS, random resampling) has data-dependent output shapes and NMS with no
    # clean Pallas equivalent; rois / rois_indices are not produced here.
    return rpn_locs, rpn_scores, rpn_fg_scores, anchor


# ----------------------------- pure-JAX reference ------------------------------
def ref_forward(x_nchw, params):
    n, cin, h, w = x_nchw.shape
    x = jnp.transpose(x_nchw, (0, 2, 3, 1)).astype(jnp.float32)
    w1_hwio = params["w1"].reshape(3, 3, cin, -1)
    hid = jax.lax.conv_general_dilated(
        x, w1_hwio, (1, 1), "SAME", dimension_numbers=("NHWC", "HWIO", "NHWC")
    ) + params["b1"]
    hid = jax.nn.relu(hid)
    loc = jnp.einsum("nhwc,cd->nhwd", hid, params["wloc"]) + params["bloc"]
    sc = jnp.einsum("nhwc,cd->nhwd", hid, params["wsc"]) + params["bsc"]
    rpn_locs = loc.reshape(n, -1, 4)
    rpn_scores = sc.reshape(n, -1, 2)
    fg = jax.nn.softmax(rpn_scores, axis=-1)[..., 1].reshape(n, -1)
    return rpn_locs, rpn_scores, fg


# ----------------------------- main --------------------------------------------
if __name__ == "__main__":
    N, CIN, CMID, H, W = 2, 32, 32, 8, 8
    A = 9  # 3 ratios x 3 scales

    key = jax.random.PRNGKey(0)
    k_x, k_x2, k_w1, k_wl, k_ws = jax.random.split(key, 5)

    # deterministic synthetic init (~ normal_init with std 0.01, zero bias)
    params = {
        "w1": 0.01 * jax.random.normal(k_w1, (9 * CIN, CMID), jnp.float32),
        "b1": jnp.zeros((1, CMID), jnp.float32),
        "wloc": 0.01 * jax.random.normal(k_wl, (CMID, 4 * A), jnp.float32),
        "bloc": jnp.zeros((1, 4 * A), jnp.float32),
        "wsc": 0.01 * jax.random.normal(k_ws, (CMID, 2 * A), jnp.float32),
        "bsc": jnp.zeros((1, 2 * A), jnp.float32),
    }

    x = jax.random.normal(k_x, (N, CIN, H, W), jnp.float32)
    ref_locs, ref_scores, ref_fg = ref_forward(x, params)

    # 1) default path: bf16 MXU operands + f32 accumulation, auto row tiling.
    locs_bf, scores_bf, fg_bf, anchor = jax.block_until_ready(
        rpn_forward(x, params, feat_stride=16)
    )
    np.testing.assert_allclose(np.asarray(locs_bf), np.asarray(ref_locs), rtol=2e-2, atol=2e-2)
    np.testing.assert_allclose(np.asarray(scores_bf), np.asarray(ref_scores), rtol=2e-2, atol=2e-2)
    np.testing.assert_allclose(np.asarray(fg_bf), np.asarray(ref_fg), rtol=2e-2, atol=2e-2)

    # 2) f32 path with explicit row_tile=8 (multi-step grid), strict tolerance.
    locs32, scores32, fg32, _ = jax.block_until_ready(
        rpn_forward(x, params, feat_stride=16, compute_dtype=jnp.float32, row_tile=8)
    )
    np.testing.assert_allclose(np.asarray(locs32), np.asarray(ref_locs), rtol=1e-5, atol=1e-5)
    np.testing.assert_allclose(np.asarray(scores32), np.asarray(ref_scores), rtol=1e-5, atol=1e-5)
    np.testing.assert_allclose(np.asarray(fg32), np.asarray(ref_fg), rtol=1e-5, atol=1e-5)

    # 3) non-dividing row_tile -> partial final grid tile (masked output block).
    H2 = 12
    x2 = jax.random.normal(k_x2, (N, CIN, H2, W), jnp.float32)
    ref2_locs, ref2_scores, ref2_fg = ref_forward(x2, params)
    locs_p, scores_p, fg_p, _ = jax.block_until_ready(
        rpn_forward(x2, params, feat_stride=16, row_tile=16)   # 24 rows -> 2 tiles, last partial
    )
    np.testing.assert_allclose(np.asarray(locs_p), np.asarray(ref2_locs), rtol=2e-2, atol=2e-2)
    np.testing.assert_allclose(np.asarray(scores_p), np.asarray(ref2_scores), rtol=2e-2, atol=2e-2)
    np.testing.assert_allclose(np.asarray(fg_p), np.asarray(ref2_fg), rtol=2e-2, atol=2e-2)

    assert locs_bf.shape == (N, H * W * A, 4)
    assert scores_bf.shape == (N, H * W * A, 2)
    assert fg_bf.shape == (N, H * W * A)
    assert anchor.shape == (1, H * W * A, 4)
    print("KERNEL_OK")
</pallas_src>

<mosaic_0001>
module attributes {stable_mosaic.version = 11 : i64} {
  func.func @rpn_kernel(%arg0: i32, %arg1: memref<16x10x96xbf16, #tpu.memory_space<vmem>>, %arg2: memref<3x96x32xbf16, #tpu.memory_space<vmem>>, %arg3: memref<1x32xf32, #tpu.memory_space<vmem>>, %arg4: memref<32x128xbf16, #tpu.memory_space<vmem>>, %arg5: memref<1x128xf32, #tpu.memory_space<vmem>>, %arg6: memref<128x128xf32, #tpu.memory_space<vmem>>) attributes {dimension_semantics = [#tpu.dimension_semantics<parallel>], iteration_bounds = array<i64: 1>, scalar_prefetch = 0 : i64, scratch_operands = 0 : i64, tpu.core_type = #tpu.core_type<tc>, window_params = [{transform_indices = @transform_0, window_bounds = array<i64: 16, 10, 96>}, {pipeline_mode = #tpu.pipeline_mode<synchronous>, transform_indices = @transform_1, window_bounds = array<i64: 3, 96, 32>}, {pipeline_mode = #tpu.pipeline_mode<synchronous>, transform_indices = @transform_2, window_bounds = array<i64: 1, 32>}, {pipeline_mode = #tpu.pipeline_mode<synchronous>, transform_indices = @transform_3, window_bounds = array<i64: 32, 128>}, {pipeline_mode = #tpu.pipeline_mode<synchronous>, transform_indices = @transform_4, window_bounds = array<i64: 1, 128>}, {transform_indices = @transform_5, window_bounds = array<i64: 128, 128>}]} {
    %cst = arith.constant 0.000000e+00 : f32
    %0 = vector.broadcast %cst : f32 to vector<128x32xf32>
    %c0 = arith.constant 0 : index
    %c0_0 = arith.constant 0 : index
    %c0_1 = arith.constant 0 : index
    %1 = vector.load %arg1[%c0, %c0_0, %c0_1] : memref<16x10x96xbf16, #tpu.memory_space<vmem>>, vector<16x8x96xbf16>
    %2 = vector.shape_cast %1 : vector<16x8x96xbf16> to vector<128x96xbf16>
    %c0_2 = arith.constant 0 : index
    %c0_3 = arith.constant 0 : index
    %c0_4 = arith.constant 0 : index
    %3 = vector.load %arg2[%c0_2, %c0_3, %c0_4] : memref<3x96x32xbf16, #tpu.memory_space<vmem>>, vector<1x96x32xbf16>
    %4 = vector.shape_cast %3 : vector<1x96x32xbf16> to vector<96x32xbf16>
    %cst_5 = arith.constant dense<0.000000e+00> : vector<128x32xf32>
    %5 = tpu.matmul %2, %4, %cst_5 {dimension_numbers = #tpu.dot_dimension_numbers<[1], [0], [0], [1], [0, 0, 1, 1], [], []>} : vector<128x96xbf16>, vector<96x32xbf16>, vector<128x32xf32> -> vector<128x32xf32>
    %6 = arith.addf %0, %5 : vector<128x32xf32>
    %c0_6 = arith.constant 0 : index
    %c1 = arith.constant 1 : index
    %c0_7 = arith.constant 0 : index
    %7 = vector.load %arg1[%c0_6, %c1, %c0_7] : memref<16x10x96xbf16, #tpu.memory_space<vmem>>, vector<16x8x96xbf16>
    %8 = vector.shape_cast %7 : vector<16x8x96xbf16> to vector<128x96xbf16>
    %c1_8 = arith.constant 1 : index
    %c0_9 = arith.constant 0 : index
    %c0_10 = arith.constant 0 : index
    %9 = vector.load %arg2[%c1_8, %c0_9, %c0_10] : memref<3x96x32xbf16, #tpu.memory_space<vmem>>, vector<1x96x32xbf16>
    %10 = vector.shape_cast %9 : vector<1x96x32xbf16> to vector<96x32xbf16>
    %cst_11 = arith.constant dense<0.000000e+00> : vector<128x32xf32>
    %11 = tpu.matmul %8, %10, %cst_11 {dimension_numbers = #tpu.dot_dimension_numbers<[1], [0], [0], [1], [0, 0, 1, 1], [], []>} : vector<128x96xbf16>, vector<96x32xbf16>, vector<128x32xf32> -> vector<128x32xf32>
    %12 = arith.addf %6, %11 : vector<128x32xf32>
    %c0_12 = arith.constant 0 : index
    %c2 = arith.constant 2 : index
    %c0_13 = arith.constant 0 : index
    %13 = vector.load %arg1[%c0_12, %c2, %c0_13] : memref<16x10x96xbf16, #tpu.memory_space<vmem>>, vector<16x8x96xbf16>
    %14 = vector.shape_cast %13 : vector<16x8x96xbf16> to vector<128x96xbf16>
    %c2_14 = arith.constant 2 : index
    %c0_15 = arith.constant 0 : index
    %c0_16 = arith.constant 0 : index
    %15 = vector.load %arg2[%c2_14, %c0_15, %c0_16] : memref<3x96x32xbf16, #tpu.memory_space<vmem>>, vector<1x96x32xbf16>
    %16 = vector.shape_cast %15 : vector<1x96x32xbf16> to vector<96x32xbf16>
    %cst_17 = arith.constant dense<0.000000e+00> : vector<128x32xf32>
    %17 = tpu.matmul %14, %16, %cst_17 {dimension_numbers = #tpu.dot_dimension_numbers<[1], [0], [0], [1], [0, 0, 1, 1], [], []>} : vector<128x96xbf16>, vector<96x32xbf16>, vector<128x32xf32> -> vector<128x32xf32>
    %18 = arith.addf %12, %17 : vector<128x32xf32>
    %c0_18 = arith.constant 0 : index
    %c0_19 = arith.constant 0 : index
    %19 = vector.load %arg3[%c0_18, %c0_19] : memref<1x32xf32, #tpu.memory_space<vmem>>, vector<1x32xf32>
    %20 = vector.broadcast %19 : vector<1x32xf32> to vector<128x32xf32>
    %21 = arith.addf %18, %20 : vector<128x32xf32>
    %cst_20 = arith.constant 0.000000e+00 : f32
    %22 = vector.broadcast %cst_20 : f32 to vector<128x32xf32>
    %23 = arith.maximumf %21, %22 : vector<128x32xf32>
    %24 = arith.truncf %23 : vector<128x32xf32> to vector<128x32xbf16>
    %c0_21 = arith.constant 0 : index
    %c0_22 = arith.constant 0 : index
    %25 = vector.load %arg4[%c0_21, %c0_22] : memref<32x128xbf16, #tpu.memory_space<vmem>>, vector<32x128xbf16>
    %cst_23 = arith.constant dense<0.000000e+00> : vector<128x128xf32>
    %26 = tpu.matmul %24, %25, %cst_23 {dimension_numbers = #tpu.dot_dimension_numbers<[1], [0], [0], [1], [0, 0, 1, 1], [], []>} : vector<128x32xbf16>, vector<32x128xbf16>, vector<128x128xf32> -> vector<128x128xf32>
    %c0_24 = arith.constant 0 : index
    %c0_25 = arith.constant 0 : index
    %27 = vector.load %arg5[%c0_24, %c0_25] : memref<1x128xf32, #tpu.memory_space<vmem>>, vector<1x128xf32>
    %28 = vector.broadcast %27 : vector<1x128xf32> to vector<128x128xf32>
    %29 = arith.addf %26, %28 : vector<128x128xf32>
    %30 = tpu.iota {dimensions = array<i32: 1>} : vector<128x128xi32>
    %c54_i32 = arith.constant 54 : i32
    %31 = vector.broadcast %c54_i32 : i32 to vector<128x128xi32>
    %32 = arith.cmpi sge, %30, %31 : vector<128x128xi32>
    %c63_i32 = arith.constant 63 : i32
    %33 = vector.broadcast %c63_i32 : i32 to vector<128x128xi32>
    %34 = arith.cmpi slt, %30, %33 : vector<128x128xi32>
    %35 = arith.andi %32, %34 : vector<128x128xi1>
    %36 = arith.negf %29 : vector<128x128xf32>
    %37 = math.exp %36 : vector<128x128xf32>
    %cst_26 = arith.constant 1.000000e+00 : f32
    %38 = vector.broadcast %cst_26 : f32 to vector<128x128xf32>
    %39 = arith.addf %38, %37 : vector<128x128xf32>
    %40 = arith.divf %38, %39 : vector<128x128xf32>
    %41 = arith.select %35, %40, %29 : vector<128x128xi1>, vector<128x128xf32>
    %c0_27 = arith.constant 0 : index
    %c0_28 = arith.constant 0 : index
    %42 = vector.load %arg6[%c0_27, %c0_28] : memref<128x128xf32, #tpu.memory_space<vmem>>, vector<128x128xf32>
    tpu.vector_store %arg6[%c0_27, %c0_28], %41 {strides = array<i32>} : memref<128x128xf32, #tpu.memory_space<vmem>>, vector<128x128xf32>,
    return
  }
  func.func @transform_0(%arg0: i32) -> (i32, i32, i32) {
    %c0_i32 = arith.constant 0 : i32
    %c0_i32_0 = arith.constant 0 : i32
    %c0_i32_1 = arith.constant 0 : i32
    return %arg0, %c0_i32, %c0_i32_0 : i32, i32, i32
  }
  func.func @transform_1(%arg0: i32) -> (i32, i32, i32) {
    %c0_i32 = arith.constant 0 : i32
    %c0_i32_0 = arith.constant 0 : i32
    %c0_i32_1 = arith.constant 0 : i32
    %c0_i32_2 = arith.constant 0 : i32
    return %c0_i32, %c0_i32_0, %c0_i32_1 : i32, i32, i32
  }
  func.func @transform_2(%arg0: i32) -> (i32, i32) {
    %c0_i32 = arith.constant 0 : i32
    %c0_i32_0 = arith.constant 0 : i32
    %c0_i32_1 = arith.constant 0 : i32
    return %c0_i32, %c0_i32_0 : i32, i32
  }
  func.func @transform_3(%arg0: i32) -> (i32, i32) {
    %c0_i32 = arith.constant 0 : i32
    %c0_i32_0 = arith.constant 0 : i32
    %c0_i32_1 = arith.constant 0 : i32
    return %c0_i32, %c0_i32_0 : i32, i32
  }
  func.func @transform_4(%arg0: i32) -> (i32, i32) {
    %c0_i32 = arith.constant 0 : i32
    %c0_i32_0 = arith.constant 0 : i32
    %c0_i32_1 = arith.constant 0 : i32
    return %c0_i32, %c0_i32_0 : i32, i32
  }
  func.func @transform_5(%arg0: i32) -> (i32, i32) {
    %c0_i32 = arith.constant 0 : i32
    %c0_i32_0 = arith.constant 0 : i32
    return %arg0, %c0_i32 : i32, i32
  }
}

module attributes {stable_mosaic.version = 11 : i64} {
  func.func @rpn_kernel(%arg0: i32, %arg1: memref<16x10x96xbf16, #tpu.memory_space<vmem>>, %arg2: memref<3x96x32xbf16, #tpu.memory_space<vmem>>, %arg3: memref<1x32xf32, #tpu.memory_space<vmem>>, %arg4: memref<32x128xbf16, #tpu.memory_space<vmem>>, %arg5: memref<1x128xf32, #tpu.memory_space<vmem>>, %arg6: memref<128x128xf32, #tpu.memory_space<vmem>>) attributes {dimension_semantics = [#tpu.dimension_semantics<parallel>], iteration_bounds = array<i64: 1>, scalar_prefetch = 0 : i64, scratch_operands = 0 : i64, tpu.core_type = #tpu.core_type<tc>, window_params = [{transform_indices = @transform_0, window_bounds = array<i64: 16, 10, 96>}, {pipeline_mode = #tpu.pipeline_mode<synchronous>, transform_indices = @transform_1, window_bounds = array<i64: 3, 96, 32>}, {pipeline_mode = #tpu.pipeline_mode<synchronous>, transform_indices = @transform_2, window_bounds = array<i64: 1, 32>}, {pipeline_mode = #tpu.pipeline_mode<synchronous>, transform_indices = @transform_3, window_bounds = array<i64: 32, 128>}, {pipeline_mode = #tpu.pipeline_mode<synchronous>, transform_indices = @transform_4, window_bounds = array<i64: 1, 128>}, {transform_indices = @transform_5, window_bounds = array<i64: 128, 128>}]} {
    %cst = arith.constant 0.000000e+00 : f32
    %0 = vector.broadcast %cst : f32 to vector<128x32xf32>
    %c0 = arith.constant 0 : index
    %c0_0 = arith.constant 0 : index
    %c0_1 = arith.constant 0 : index
    %1 = vector.load %arg1[%c0, %c0_0, %c0_1] : memref<16x10x96xbf16, #tpu.memory_space<vmem>>, vector<16x8x96xbf16>
    %2 = vector.shape_cast %1 : vector<16x8x96xbf16> to vector<128x96xbf16>
    %c0_2 = arith.constant 0 : index
    %c0_3 = arith.constant 0 : index
    %c0_4 = arith.constant 0 : index
    %3 = vector.load %arg2[%c0_2, %c0_3, %c0_4] : memref<3x96x32xbf16, #tpu.memory_space<vmem>>, vector<1x96x32xbf16>
    %4 = vector.shape_cast %3 : vector<1x96x32xbf16> to vector<96x32xbf16>
    %cst_5 = arith.constant dense<0.000000e+00> : vector<128x32xf32>
    %5 = tpu.matmul %2, %4, %cst_5 {dimension_numbers = #tpu.dot_dimension_numbers<[1], [0], [0], [1], [0, 0, 1, 1], [], []>} : vector<128x96xbf16>, vector<96x32xbf16>, vector<128x32xf32> -> vector<128x32xf32>
    %6 = arith.addf %0, %5 : vector<128x32xf32>
    %c0_6 = arith.constant 0 : index
    %c1 = arith.constant 1 : index
    %c0_7 = arith.constant 0 : index
    %7 = vector.load %arg1[%c0_6, %c1, %c0_7] : memref<16x10x96xbf16, #tpu.memory_space<vmem>>, vector<16x8x96xbf16>
    %8 = vector.shape_cast %7 : vector<16x8x96xbf16> to vector<128x96xbf16>
    %c1_8 = arith.constant 1 : index
    %c0_9 = arith.constant 0 : index
    %c0_10 = arith.constant 0 : index
    %9 = vector.load %arg2[%c1_8, %c0_9, %c0_10] : memref<3x96x32xbf16, #tpu.memory_space<vmem>>, vector<1x96x32xbf16>
    %10 = vector.shape_cast %9 : vector<1x96x32xbf16> to vector<96x32xbf16>
    %cst_11 = arith.constant dense<0.000000e+00> : vector<128x32xf32>
    %11 = tpu.matmul %8, %10, %cst_11 {dimension_numbers = #tpu.dot_dimension_numbers<[1], [0], [0], [1], [0, 0, 1, 1], [], []>} : vector<128x96xbf16>, vector<96x32xbf16>, vector<128x32xf32> -> vector<128x32xf32>
    %12 = arith.addf %6, %11 : vector<128x32xf32>
    %c0_12 = arith.constant 0 : index
    %c2 = arith.constant 2 : index
    %c0_13 = arith.constant 0 : index
    %13 = vector.load %arg1[%c0_12, %c2, %c0_13] : memref<16x10x96xbf16, #tpu.memory_space<vmem>>, vector<16x8x96xbf16>
    %14 = vector.shape_cast %13 : vector<16x8x96xbf16> to vector<128x96xbf16>
    %c2_14 = arith.constant 2 : index
    %c0_15 = arith.constant 0 : index
    %c0_16 = arith.constant 0 : index
    %15 = vector.load %arg2[%c2_14, %c0_15, %c0_16] : memref<3x96x32xbf16, #tpu.memory_space<vmem>>, vector<1x96x32xbf16>
    %16 = vector.shape_cast %15 : vector<1x96x32xbf16> to vector<96x32xbf16>
    %cst_17 = arith.constant dense<0.000000e+00> : vector<128x32xf32>
    %17 = tpu.matmul %14, %16, %cst_17 {dimension_numbers = #tpu.dot_dimension_numbers<[1], [0], [0], [1], [0, 0, 1, 1], [], []>} : vector<128x96xbf16>, vector<96x32xbf16>, vector<128x32xf32> -> vector<128x32xf32>
    %18 = arith.addf %12, %17 : vector<128x32xf32>
    %c0_18 = arith.constant 0 : index
    %c0_19 = arith.constant 0 : index
    %19 = vector.load %arg3[%c0_18, %c0_19] : memref<1x32xf32, #tpu.memory_space<vmem>>, vector<1x32xf32>
    %20 = vector.broadcast %19 : vector<1x32xf32> to vector<128x32xf32>
    %21 = arith.addf %18, %20 : vector<128x32xf32>
    %cst_20 = arith.constant 0.000000e+00 : f32
    %22 = vector.broadcast %cst_20 : f32 to vector<128x32xf32>
    %23 = arith.maximumf %21, %22 : vector<128x32xf32>
    %24 = arith.truncf %23 : vector<128x32xf32> to vector<128x32xbf16>
    %c0_21 = arith.constant 0 : index
    %c0_22 = arith.constant 0 : index
    %25 = vector.load %arg4[%c0_21, %c0_22] : memref<32x128xbf16, #tpu.memory_space<vmem>>, vector<32x128xbf16>
    %cst_23 = arith.constant dense<0.000000e+00> : vector<128x128xf32>
    %26 = tpu.matmul %24, %25, %cst_23 {dimension_numbers = #tpu.dot_dimension_numbers<[1], [0], [0], [1], [0, 0, 1, 1], [], []>} : vector<128x32xbf16>, vector<32x128xbf16>, vector<128x128xf32> -> vector<128x128xf32>
    %c0_24 = arith.constant 0 : index
    %c0_25 = arith.constant 0 : index
    %27 = vector.load %arg5[%c0_24, %c0_25] : memref<1x128xf32, #tpu.memory_space<vmem>>, vector<1x128xf32>
    %28 = vector.broadcast %27 : vector<1x128xf32> to vector<128x128xf32>
    %29 = arith.addf %26, %28 : vector<128x128xf32>
    %30 = tpu.iota {dimensions = array<i32: 1>} : vector<128x128xi32>
    %c54_i32 = arith.constant 54 : i32
    %31 = vector.broadcast %c54_i32 : i32 to vector<128x128xi32>
    %32 = arith.cmpi sge, %30, %31 : vector<128x128xi32>
    %c63_i32 = arith.constant 63 : i32
    %33 = vector.broadcast %c63_i32 : i32 to vector<128x128xi32>
    %34 = arith.cmpi slt, %30, %33 : vector<128x128xi32>
    %35 = arith.andi %32, %34 : vector<128x128xi1>
    %36 = arith.negf %29 : vector<128x128xf32>
    %37 = math.exp %36 : vector<128x128xf32>
    %cst_26 = arith.constant 1.000000e+00 : f32
    %38 = vector.broadcast %cst_26 : f32 to vector<128x128xf32>
    %39 = arith.addf %38, %37 : vector<128x128xf32>
    %40 = arith.divf %38, %39 : vector<128x128xf32>
    %41 = arith.select %35, %40, %29 : vector<128x128xi1>, vector<128x128xf32>
    %c0_27 = arith.constant 0 : index
    %c0_28 = arith.constant 0 : index
    %42 = vector.load %arg6[%c0_27, %c0_28] : memref<128x128xf32, #tpu.memory_space<vmem>>, vector<128x128xf32>
    tpu.vector_store %arg6[%c0_27, %c0_28], %41 {strides = array<i32>} : memref<128x128xf32, #tpu.memory_space<vmem>>, vector<128x128xf32>,
    return
  }
  func.func @transform_0(%arg0: i32) -> (i32, i32, i32) {
    %c0_i32 = arith.constant 0 : i32
    %c0_i32_0 = arith.constant 0 : i32
    %c0_i32_1 = arith.constant 0 : i32
    return %arg0, %c0_i32, %c0_i32_0 : i32, i32, i32
  }
  func.func @transform_1(%arg0: i32) -> (i32, i32, i32) {
    %c0_i32 = arith.constant 0 : i32
    %c0_i32_0 = arith.constant 0 : i32
    %c0_i32_1 = arith.constant 0 : i32
    %c0_i32_2 = arith.constant 0 : i32
    return %c0_i32, %c0_i32_0, %c0_i32_1 : i32, i32, i32
  }
  func.func @transform_2(%arg0: i32) -> (i32, i32) {
    %c0_i32 = arith.constant 0 : i32
    %c0_i32_0 = arith.constant 0 : i32
    %c0_i32_1 = arith.constant 0 : i32
    return %c0_i32, %c0_i32_0 : i32, i32
  }
  func.func @transform_3(%arg0: i32) -> (i32, i32) {
    %c0_i32 = arith.constant 0 : i32
    %c0_i32_0 = arith.constant 0 : i32
    %c0_i32_1 = arith.constant 0 : i32
    return %c0_i32, %c0_i32_0 : i32, i32
  }
  func.func @transform_4(%arg0: i32) -> (i32, i32) {
    %c0_i32 = arith.constant 0 : i32
    %c0_i32_0 = arith.constant 0 : i32
    %c0_i32_1 = arith.constant 0 : i32
    return %c0_i32, %c0_i32_0 : i32, i32
  }
  func.func @transform_5(%arg0: i32) -> (i32, i32) {
    %c0_i32 = arith.constant 0 : i32
    %c0_i32_0 = arith.constant 0 : i32
    return %arg0, %c0_i32 : i32, i32
  }
}

</mosaic_0001>

<llo_original>
// kernel: tpu_custom_call.1
$region0: #{tpu_custom_call.1}
  #allocation0 [shape = 'u32[]', space=smem, size = 0x4, offset = 0x4, fixed_abs, tag = 'smem constant byte address 0x4 - core index']
  #allocation1 [shape = 'u32[72,128]{1,0:T(1,128)}', space=vmem, size = 0x9000, scoped, tag = 'internal scratch']
  %s0 = inlined_call_operand.vmem [shape: bf16[16,10,96], index: 0, kind: input, shape index: {}]
  %s1 = inlined_call_operand.vmem [shape: bf16[3,96,32], index: 1, kind: input, shape index: {}]
  %s2 = inlined_call_operand.vmem [shape: f32[1,32], index: 2, kind: input, shape index: {}]
  %s3 = inlined_call_operand.vmem [shape: bf16[32,128], index: 3, kind: input, shape index: {}]
  %s4 = inlined_call_operand.vmem [shape: f32[1,128], index: 4, kind: input, shape index: {}]
  %s5 = inlined_call_operand.hbm [shape: f32[128,128], index: 5, kind: output, shape index: {}]
  %s6 = sld [smem:[#allocation0]]
  $region30: #{tpu_custom_call.1} parent=0
    _
  %s8 = ssub.s32 1, %s6
  %s9 = scalar_select 0, %s8, %s6
  $region1: #{tpu_custom_call.1} parent=0
    #allocation2 [shape = 'u8[65536]{0}', space=vmem, size = 0x10000, scoped, tag = 'output window, operand 0, single buffered']
    #allocation3 [shape = 's32[1]{0}', space=sflag, size = 0x4, scoped, tag = 'scoped memory for tpu_custom_call.1']
    %10 = vsyncpa [#allocation3], 0
    // Predicated region
    $region2: #{tpu_custom_call.1} parent=1 // pred_check
      _
    $region3: #{tpu_custom_call.1} parent=1 // pred_check_branch
      %12 = sbr.rel (0) target = $region5
    $region4: #{tpu_custom_call.1} parent=1 // pred_region
      _
    $region5: #{tpu_custom_call.1} parent=1 // pred_fallthru
      _
    // Predicated region
    $region6: #{tpu_custom_call.1} parent=1 // pred_check
      _
    $region7: #{tpu_custom_call.1} parent=1 // pred_check_branch
      %14 = sbr.rel (0) target = $region9
    $region8: #{tpu_custom_call.1} parent=1 // pred_region
      _
    $region9: #{tpu_custom_call.1} parent=1 // pred_fallthru
      _
    // Predicated region
    $region10: #{tpu_custom_call.1} parent=1 // pred_check
      _
    $region11: #{tpu_custom_call.1} parent=1 // pred_check_branch
      %16 = sbr.rel (0) target = $region13
    $region12: #{tpu_custom_call.1} parent=1 // pred_region
      _
    $region13: #{tpu_custom_call.1} parent=1 // pred_fallthru
      _
    // Predicated region
    $region14: #{tpu_custom_call.1} parent=1 // pred_check
      _
    $region15: #{tpu_custom_call.1} parent=1 // pred_check_branch
      %18 = sbr.rel (0) target = $region17
    $region16: #{tpu_custom_call.1} parent=1 // pred_region
      _
    $region17: #{tpu_custom_call.1} parent=1 // pred_fallthru
      _
    // Predicated region
    $region18: #{tpu_custom_call.1} parent=1 // pred_check
      _
    $region19: #{tpu_custom_call.1} parent=1 // pred_check_branch
      %20 = sbr.rel (0) target = $region21
    $region20: #{tpu_custom_call.1} parent=1 // pred_region
      _
    $region21: #{tpu_custom_call.1} parent=1 // pred_fallthru
      _
    %v22 = vld [vmem:[%s0] sm:$0xf]
    %v23 = vld [vmem:[%s0 + $0x8] sm:$0xf]
    %v24 = vld [vmem:[%s0 + $0x10] sm:$0xf]
    %v25 = vld [vmem:[%s0 + $0x18] sm:$0xf]
    %v26 = vld [vmem:[%s0 + $0x20] sm:$0xf]
    %v27 = vld [vmem:[%s0 + $0x28] sm:$0xf]
    %v28 = vld [vmem:[%s0 + $0x30] sm:$0xf]
    %v29 = vld [vmem:[%s0 + $0x38] sm:$0xf]
    %v30 = vld [vmem:[%s0 + $0x40] sm:$0xf]
    %v31 = vld [vmem:[%s0 + $0x48] sm:$0xf]
    %v32 = vld [vmem:[%s0 + $0x50] sm:$0xf]
    %v33 = vld [vmem:[%s0 + $0x58] sm:$0xf]
    %v34 = vld [vmem:[%s0 + $0x60] sm:$0xf]
    %v35 = vld [vmem:[%s0 + $0x68] sm:$0xf]
    %v36 = vld [vmem:[%s0 + $0x70] sm:$0xf]
    %v37 = vld [vmem:[%s0 + $0x78] sm:$0xf]
    %v38 = vld [vmem:[%s1] sm:$0xf]
    %v39 = vld [vmem:[%s1 + $0x4] sm:$0xf]
    %v40 = vld [vmem:[%s1 + $0x8] sm:$0xf]
    %v41 = vld [vmem:[%s1 + $0xc] sm:$0xf]
    %v42 = vld [vmem:[%s1 + $0x10] sm:$0xf]
    %v43 = vld [vmem:[%s1 + $0x14] sm:$0xf]
    %v44 = vld [vmem:[%s1 + $0x18] sm:$0xf]
    %v45 = vld [vmem:[%s1 + $0x1c] sm:$0xf]
    %v46 = vld [vmem:[%s1 + $0x20] sm:$0xf]
    %v47 = vld [vmem:[%s1 + $0x24] sm:$0xf]
    %v48 = vld [vmem:[%s1 + $0x28] sm:$0xf]
    %v49 = vld [vmem:[%s1 + $0x2c] sm:$0xf]
    %v50 = vld [vmem:[%s0 + $0x4] sm:$0x1]
    %v51 = vld [vmem:[%s0 + $0xc] sm:$0x1]
    %v52 = vld [vmem:[%s0 + $0x14] sm:$0x1]
    %v53 = vld [vmem:[%s0 + $0x1c] sm:$0x1]
    %v54 = vld [vmem:[%s0 + $0x24] sm:$0x1]
    %v55 = vld [vmem:[%s0 + $0x2c] sm:$0x1]
    %v56 = vld [vmem:[%s0 + $0x34] sm:$0x1]
    %v57 = vld [vmem:[%s0 + $0x3c] sm:$0x1]
    %v58 = vld [vmem:[%s0 + $0x44] sm:$0x1]
    %v59 = vld [vmem:[%s0 + $0x4c] sm:$0x1]
    %v60 = vld [vmem:[%s0 + $0x54] sm:$0x1]
    %v61 = vld [vmem:[%s0 + $0x5c] sm:$0x1]
    %v62 = vld [vmem:[%s0 + $0x64] sm:$0x1]
    %v63 = vld [vmem:[%s0 + $0x6c] sm:$0x1]
    %v64 = vld [vmem:[%s0 + $0x74] sm:$0x1]
    %v65 = vld [vmem:[%s0 + $0x7c] sm:$0x1]
    %vm66 = vsmask.f32 3328
    %vm67 = vsmask.f32 7440
    %vm68 = vmor %vm66, %vm67
    %v70 = vshrl.u32 %v22, 16
    %v72 = vrot.slane %v70, 4
    %v73 = vshll.u32 %v22, 16
    %v75 = vrot.slane %v73, 5
    %v76 = vor.u32 %v72, %v75
    %v77 = vrot.slane %v76, 4
    %v79 = vshll.u32 %v50, 16
    %v81 = vrot.slane %v79, 5
    %v82 = vsel %vm68, %v77, %v81
    %v84 = vshrl.u32 %v23, 16
    %v86 = vrot.slane %v84, 4
    %v87 = vshll.u32 %v23, 16
    %v89 = vrot.slane %v87, 5
    %v90 = vor.u32 %v86, %v89
    %v91 = vrot.slane %v90, 4
    %v93 = vshll.u32 %v51, 16
    %v95 = vrot.slane %v93, 5
    %v96 = vsel %vm68, %v91, %v95
    %v98 = vshrl.u32 %v24, 16
    %v100 = vrot.slane %v98, 4
    %v101 = vshll.u32 %v24, 16
    %v103 = vrot.slane %v101, 5
    %v104 = vor.u32 %v100, %v103
    %v105 = vrot.slane %v104, 4
    %v107 = vshll.u32 %v52, 16
    %v109 = vrot.slane %v107, 5
    %v110 = vsel %vm68, %v105, %v109
    %v112 = vshrl.u32 %v25, 16
    %v114 = vrot.slane %v112, 4
    %v115 = vshll.u32 %v25, 16
    %v117 = vrot.slane %v115, 5
    %v118 = vor.u32 %v114, %v117
    %v119 = vrot.slane %v118, 4
    %v121 = vshll.u32 %v53, 16
    %v123 = vrot.slane %v121, 5
    %v124 = vsel %vm68, %v119, %v123
    %v126 = vshrl.u32 %v26, 16
    %v128 = vrot.slane %v126, 4
    %v129 = vshll.u32 %v26, 16
    %v131 = vrot.slane %v129, 5
    %v132 = vor.u32 %v128, %v131
    %v133 = vrot.slane %v132, 4
    %v135 = vshll.u32 %v54, 16
    %v137 = vrot.slane %v135, 5
    %v138 = vsel %vm68, %v133, %v137
    %v140 = vshrl.u32 %v27, 16
    %v142 = vrot.slane %v140, 4
    %v143 = vshll.u32 %v27, 16
    %v145 = vrot.slane %v143, 5
    %v146 = vor.u32 %v142, %v145
    %v147 = vrot.slane %v146, 4
    %v149 = vshll.u32 %v55, 16
    %v151 = vrot.slane %v149, 5
    %v152 = vsel %vm68, %v147, %v151
    %v154 = vshrl.u32 %v28, 16
    %v156 = vrot.slane %v154, 4
    %v157 = vshll.u32 %v28, 16
    %v159 = vrot.slane %v157, 5
    %v160 = vor.u32 %v156, %v159
    %v161 = vrot.slane %v160, 4
    %v163 = vshll.u32 %v56, 16
    %v165 = vrot.slane %v163, 5
    %v166 = vsel %vm68, %v161, %v165
    %v168 = vshrl.u32 %v29, 16
    %v170 = vrot.slane %v168, 4
    %v171 = vshll.u32 %v29, 16
    %v173 = vrot.slane %v171, 5
    %v174 = vor.u32 %v170, %v173
    %v175 = vrot.slane %v174, 4
    %v177 = vshll.u32 %v57, 16
    %v179 = vrot.slane %v177, 5
    %v180 = vsel %vm68, %v175, %v179
    %v182 = vshrl.u32 %v30, 16
    %v184 = vrot.slane %v182, 4
    %v185 = vshll.u32 %v30, 16
    %v187 = vrot.slane %v185, 5
    %v188 = vor.u32 %v184, %v187
    %v189 = vrot.slane %v188, 4
    %v191 = vshll.u32 %v58, 16
    %v193 = vrot.slane %v191, 5
    %v194 = vsel %vm68, %v189, %v193
    %v196 = vshrl.u32 %v31, 16
    %v198 = vrot.slane %v196, 4
    %v199 = vshll.u32 %v31, 16
    %v201 = vrot.slane %v199, 5
    %v202 = vor.u32 %v198, %v201
    %v203 = vrot.slane %v202, 4
    %v205 = vshll.u32 %v59, 16
    %v207 = vrot.slane %v205, 5
    %v208 = vsel %vm68, %v203, %v207
    %v210 = vshrl.u32 %v32, 16
    %v212 = vrot.slane %v210, 4
    %v213 = vshll.u32 %v32, 16
    %v215 = vrot.slane %v213, 5
    %v216 = vor.u32 %v212, %v215
    %v217 = vrot.slane %v216, 4
    %v219 = vshll.u32 %v60, 16
    %v221 = vrot.slane %v219, 5
    %v222 = vsel %vm68, %v217, %v221
    %v224 = vshrl.u32 %v33, 16
    %v226 = vrot.slane %v224, 4
    %v227 = vshll.u32 %v33, 16
    %v229 = vrot.slane %v227, 5
    %v230 = vor.u32 %v226, %v229
    %v231 = vrot.slane %v230, 4
    %v233 = vshll.u32 %v61, 16
    %v235 = vrot.slane %v233, 5
    %v236 = vsel %vm68, %v231, %v235
    %v238 = vshrl.u32 %v34, 16
    %v240 = vrot.slane %v238, 4
    %v241 = vshll.u32 %v34, 16
    %v243 = vrot.slane %v241, 5
    %v244 = vor.u32 %v240, %v243
    %v245 = vrot.slane %v244, 4
    %v247 = vshll.u32 %v62, 16
    %v249 = vrot.slane %v247, 5
    %v250 = vsel %vm68, %v245, %v249
    %v252 = vshrl.u32 %v35, 16
    %v254 = vrot.slane %v252, 4
    %v255 = vshll.u32 %v35, 16
    %v257 = vrot.slane %v255, 5
    %v258 = vor.u32 %v254, %v257
    %v259 = vrot.slane %v258, 4
    %v261 = vshll.u32 %v63, 16
    %v263 = vrot.slane %v261, 5
    %v264 = vsel %vm68, %v259, %v263
    %v266 = vshrl.u32 %v36, 16
    %v268 = vrot.slane %v266, 4
    %v269 = vshll.u32 %v36, 16
    %v271 = vrot.slane %v269, 5
    %v272 = vor.u32 %v268, %v271
    %v273 = vrot.slane %v272, 4
    %v275 = vshll.u32 %v64, 16
    %v277 = vrot.slane %v275, 5
    %v278 = vsel %vm68, %v273, %v277
    %v280 = vshrl.u32 %v37, 16
    %v282 = vrot.slane %v280, 4
    %v283 = vshll.u32 %v37, 16
    %v285 = vrot.slane %v283, 5
    %v286 = vor.u32 %v282, %v285
    %v287 = vrot.slane %v286, 4
    %v289 = vshll.u32 %v65, 16
    %v291 = vrot.slane %v289, 5
    %v292 = vsel %vm68, %v287, %v291
    %s293 = scalar_lea.vmem %s1, 48
    %v294 = vld [vmem:[%s293] sm:$0xf]
    %v295 = vld [vmem:[%s293 + $0x4] sm:$0xf]
    %v296 = vld [vmem:[%s293 + $0x8] sm:$0xf]
    %v297 = vld [vmem:[%s293 + $0xc] sm:$0xf]
    %v298 = vld [vmem:[%s293 + $0x10] sm:$0xf]
    %v299 = vld [vmem:[%s293 + $0x14] sm:$0xf]
    %v300 = vld [vmem:[%s293 + $0x18] sm:$0xf]
    %v301 = vld [vmem:[%s293 + $0x1c] sm:$0xf]
    %v302 = vld [vmem:[%s293 + $0x20] sm:$0xf]
    %v303 = vld [vmem:[%s293 + $0x24] sm:$0xf]
    %v304 = vld [vmem:[%s293 + $0x28] sm:$0xf]
    %v305 = vld [vmem:[%s293 + $0x2c] sm:$0xf]
    %v306 = vunpack.c.l.b16 %v82
    %v307 = vunpack.c.l.b16 %v96
    %v308 = vunpack.c.l.b16 %v110
    %v309 = vunpack.c.l.b16 %v124
    %v310 = vunpack.c.l.b16 %v138
    %v311 = vunpack.c.l.b16 %v152
    %v312 = vunpack.c.l.b16 %v166
    %v313 = vunpack.c.l.b16 %v180
    %v314 = vunpack.c.l.b16 %v194
    %v315 = vunpack.c.l.b16 %v208
    %v316 = vunpack.c.l.b16 %v222
    %v317 = vunpack.c.l.b16 %v236
    %v318 = vunpack.c.l.b16 %v250
    %v319 = vunpack.c.l.b16 %v264
    %v320 = vunpack.c.l.b16 %v278
    %v321 = vunpack.c.l.b16 %v292
    %v322 = vpack.c.b16 %v307, %v306
    %v323 = vpack.c.b16 %v309, %v308
    %v324 = vpack.c.b16 %v311, %v310
    %v325 = vpack.c.b16 %v313, %v312
    %v326 = vpack.c.b16 %v315, %v314
    %v327 = vpack.c.b16 %v317, %v316
    %v328 = vpack.c.b16 %v319, %v318
    %v329 = vpack.c.b16 %v321, %v320
    %v342 = vunpack.c.l.b16 %v294
    %v343 = vunpack.c.l.b16 %v295
    %v344 = vunpack.c.l.b16 %v296
    %v345 = vunpack.c.l.b16 %v297
    %v346 = vunpack.c.l.b16 %v298
    %v347 = vunpack.c.l.b16 %v299
    %v348 = vunpack.c.l.b16 %v300
    %v349 = vunpack.c.l.b16 %v301
    %v350 = vunpack.c.l.b16 %v302
    %v351 = vunpack.c.l.b16 %v303
    %v352 = vunpack.c.l.b16 %v304
    %v353 = vunpack.c.l.b16 %v305
    %v354 = vpack.c.b16 %v343, %v342
    %v355 = vpack.c.b16 %v345, %v344
    %v356 = vpack.c.b16 %v347, %v346
    %v357 = vpack.c.b16 %v349, %v348
    %v358 = vpack.c.b16 %v351, %v350
    %v359 = vpack.c.b16 %v353, %v352
    %vm366 = vcmask 785408
    %v368 = vsel %vm366, %v322, 0
    %v371 = vsel %vm366, %v323, 0
    %v374 = vsel %vm366, %v324, 0
    %v377 = vsel %vm366, %v325, 0
    %v380 = vsel %vm366, %v326, 0
    %v383 = vsel %vm366, %v327, 0
    %v386 = vsel %vm366, %v328, 0
    %v389 = vsel %vm366, %v329, 0
    %391 = vmatpush.bf16.msra.mxu0 0
    %392 = vmatpush.bf16.msra.mxu0 0
    %393 = vmatpush.bf16.msra.mxu0 %v359
    %394 = vmatpush.bf16.msra.mxu0 %v358
    %395 = vmatpush.bf16.msra.mxu0 %v357
    %396 = vmatpush.bf16.msra.mxu0 %v356
    %397 = vmatpush.bf16.msra.mxu0 %v355
    %398 = vmatpush.bf16.msra.mxu0 %v354
    %399 = vmatmul.bf16.gmra.mxu0 %v368
    %v400 = vpop.f32.mrf.mxu0
    %v401 = vadd.f32 0.0, %v400
    %v402 = vpop.f32.mrf.mxu0
    %v403 = vadd.f32 0.0, %v402
    %404 = vmatmul.bf16.gmra.mxu0 %v371
    %v405 = vpop.f32.mrf.mxu0
    %v406 = vadd.f32 0.0, %v405
    %v407 = vpop.f32.mrf.mxu0
    %v408 = vadd.f32 0.0, %v407
    %409 = vmatmul.bf16.gmra.mxu0 %v374
    %v410 = vpop.f32.mrf.mxu0
    %v411 = vadd.f32 0.0, %v410
    %v412 = vpop.f32.mrf.mxu0
    %v413 = vadd.f32 0.0, %v412
    %414 = vmatmul.bf16.gmra.mxu0 %v377
    %v415 = vpop.f32.mrf.mxu0
    %v416 = vadd.f32 0.0, %v415
    %v417 = vpop.f32.mrf.mxu0
    %v418 = vadd.f32 0.0, %v417
    %419 = vmatmul.bf16.gmra.mxu0 %v380
    %v420 = vpop.f32.mrf.mxu0
    %v421 = vadd.f32 0.0, %v420
    %v422 = vpop.f32.mrf.mxu0
    %v423 = vadd.f32 0.0, %v422
    %424 = vmatmul.bf16.gmra.mxu0 %v383
    %v425 = vpop.f32.mrf.mxu0
    %v426 = vadd.f32 0.0, %v425
    %v427 = vpop.f32.mrf.mxu0
    %v428 = vadd.f32 0.0, %v427
    %429 = vmatmul.bf16.gmra.mxu0 %v386
    %v430 = vpop.f32.mrf.mxu0
    %v431 = vadd.f32 0.0, %v430
    %v432 = vpop.f32.mrf.mxu0
    %v433 = vadd.f32 0.0, %v432
    %434 = vmatmul.bf16.gmra.mxu0 %v389
    %v435 = vpop.f32.mrf.mxu0
    %v436 = vadd.f32 0.0, %v435
    %v437 = vpop.f32.mrf.mxu0
    %v438 = vadd.f32 0.0, %v437
    %439 = vdwg.mxu0
    %v456 = vunpack.c.l.b16 %v22
    %v457 = vunpack.c.l.b16 %v23
    %v458 = vunpack.c.l.b16 %v24
    %v459 = vunpack.c.l.b16 %v25
    %v460 = vunpack.c.l.b16 %v26
    %v461 = vunpack.c.l.b16 %v27
    %v462 = vunpack.c.l.b16 %v28
    %v463 = vunpack.c.l.b16 %v29
    %v464 = vunpack.c.l.b16 %v30
    %v465 = vunpack.c.l.b16 %v31
    %v466 = vunpack.c.l.b16 %v32
    %v467 = vunpack.c.l.b16 %v33
    %v468 = vunpack.c.l.b16 %v34
    %v469 = vunpack.c.l.b16 %v35
    %v470 = vunpack.c.l.b16 %v36
    %v471 = vunpack.c.l.b16 %v37
    %v472 = vpack.c.b16 %v457, %v456
    %v473 = vpack.c.b16 %v459, %v458
    %v474 = vpack.c.b16 %v461, %v460
    %v475 = vpack.c.b16 %v463, %v462
    %v476 = vpack.c.b16 %v465, %v464
    %v477 = vpack.c.b16 %v467, %v466
    %v478 = vpack.c.b16 %v469, %v468
    %v479 = vpack.c.b16 %v471, %v470
    %v492 = vunpack.c.l.b16 %v38
    %v493 = vunpack.c.l.b16 %v39
    %v494 = vunpack.c.l.b16 %v40
    %v495 = vunpack.c.l.b16 %v41
    %v496 = vunpack.c.l.b16 %v42
    %v497 = vunpack.c.l.b16 %v43
    %v498 = vunpack.c.l.b16 %v44
    %v499 = vunpack.c.l.b16 %v45
    %v500 = vunpack.c.l.b16 %v46
    %v501 = vunpack.c.l.b16 %v47
    %v502 = vunpack.c.l.b16 %v48
    %v503 = vunpack.c.l.b16 %v49
    %v504 = vpack.c.b16 %v493, %v492
    %v505 = vpack.c.b16 %v495, %v494
    %v506 = vpack.c.b16 %v497, %v496
    %v507 = vpack.c.b16 %v499, %v498
    %v508 = vpack.c.b16 %v501, %v500
    %v509 = vpack.c.b16 %v503, %v502
    %v517 = vsel %vm366, %v472, 0
    %v520 = vsel %vm366, %v473, 0
    %v523 = vsel %vm366, %v474, 0
    %v526 = vsel %vm366, %v475, 0
    %v529 = vsel %vm366, %v476, 0
    %v532 = vsel %vm366, %v477, 0
    %v535 = vsel %vm366, %v478, 0
    %v538 = vsel %vm366, %v479, 0
    %540 = vmatpush.bf16.msra.mxu0 0
    %541 = vmatpush.bf16.msra.mxu0 0
    %542 = vmatpush.bf16.msra.mxu0 %v509
    %543 = vmatpush.bf16.msra.mxu0 %v508
    %544 = vmatpush.bf16.msra.mxu0 %v507
    %545 = vmatpush.bf16.msra.mxu0 %v506
    %546 = vmatpush.bf16.msra.mxu0 %v505
    %547 = vmatpush.bf16.msra.mxu0 %v504
    %548 = vmatmul.bf16.gmra.mxu0 %v517
    %v549 = vpop.f32.mrf.mxu0
    %v550 = vadd.f32 %v401, %v549
    %v551 = vpop.f32.mrf.mxu0
    %v552 = vadd.f32 %v403, %v551
    %553 = vmatmul.bf16.gmra.mxu0 %v520
    %v554 = vpop.f32.mrf.mxu0
    %v555 = vadd.f32 %v406, %v554
    %v556 = vpop.f32.mrf.mxu0
    %v557 = vadd.f32 %v408, %v556
    %558 = vmatmul.bf16.gmra.mxu0 %v523
    %v559 = vpop.f32.mrf.mxu0
    %v560 = vadd.f32 %v411, %v559
    %v561 = vpop.f32.mrf.mxu0
    %v562 = vadd.f32 %v413, %v561
    %563 = vmatmul.bf16.gmra.mxu0 %v526
    %v564 = vpop.f32.mrf.mxu0
    %v565 = vadd.f32 %v416, %v564
    %v566 = vpop.f32.mrf.mxu0
    %v567 = vadd.f32 %v418, %v566
    %568 = vmatmul.bf16.gmra.mxu0 %v529
    %v569 = vpop.f32.mrf.mxu0
    %v570 = vadd.f32 %v421, %v569
    %v571 = vpop.f32.mrf.mxu0
    %v572 = vadd.f32 %v423, %v571
    %573 = vmatmul.bf16.gmra.mxu0 %v532
    %v574 = vpop.f32.mrf.mxu0
    %v575 = vadd.f32 %v426, %v574
    %v576 = vpop.f32.mrf.mxu0
    %v577 = vadd.f32 %v428, %v576
    %578 = vmatmul.bf16.gmra.mxu0 %v535
    %v579 = vpop.f32.mrf.mxu0
    %v580 = vadd.f32 %v431, %v579
    %v581 = vpop.f32.mrf.mxu0
    %v582 = vadd.f32 %v433, %v581
    %583 = vmatmul.bf16.gmra.mxu0 %v538
    %v584 = vpop.f32.mrf.mxu0
    %v585 = vadd.f32 %v436, %v584
    %v586 = vpop.f32.mrf.mxu0
    %v587 = vadd.f32 %v438, %v586
    %588 = vdwg.mxu0
    %v589 = vld [vmem:[%s0] sm:$0xe]
    %v590 = vld [vmem:[%s0 + $0x8] sm:$0xe]
    %v591 = vld [vmem:[%s0 + $0x10] sm:$0xe]
    %v592 = vld [vmem:[%s0 + $0x18] sm:$0xe]
    %v593 = vld [vmem:[%s0 + $0x20] sm:$0xe]
    %v594 = vld [vmem:[%s0 + $0x28] sm:$0xe]
    %v595 = vld [vmem:[%s0 + $0x30] sm:$0xe]
    %v596 = vld [vmem:[%s0 + $0x38] sm:$0xe]
    %v597 = vld [vmem:[%s0 + $0x40] sm:$0xe]
    %v598 = vld [vmem:[%s0 + $0x48] sm:$0xe]
    %v599 = vld [vmem:[%s0 + $0x50] sm:$0xe]
    %v600 = vld [vmem:[%s0 + $0x58] sm:$0xe]
    %v601 = vld [vmem:[%s0 + $0x60] sm:$0xe]
    %v602 = vld [vmem:[%s0 + $0x68] sm:$0xe]
    %v603 = vld [vmem:[%s0 + $0x70] sm:$0xe]
    %v604 = vld [vmem:[%s0 + $0x78] sm:$0xe]
    %vm637 = vcmask 1042432
    %vm638 = vcmask 1046532
    %vm639 = vmor %vm637, %vm638
    %v640 = vrot.slane %v589, 5
    %v641 = vrot.slane %v640, 4
    %v642 = vrot.slane %v50, 5
    %v643 = vsel %vm639, %v641, %v642
    %v644 = vrot.slane %v590, 5
    %v645 = vrot.slane %v644, 4
    %v646 = vrot.slane %v51, 5
    %v647 = vsel %vm639, %v645, %v646
    %v648 = vrot.slane %v591, 5
    %v649 = vrot.slane %v648, 4
    %v650 = vrot.slane %v52, 5
    %v651 = vsel %vm639, %v649, %v650
    %v652 = vrot.slane %v592, 5
    %v653 = vrot.slane %v652, 4
    %v654 = vrot.slane %v53, 5
    %v655 = vsel %vm639, %v653, %v654
    %v656 = vrot.slane %v593, 5
    %v657 = vrot.slane %v656, 4
    %v658 = vrot.slane %v54, 5
    %v659 = vsel %vm639, %v657, %v658
    %v660 = vrot.slane %v594, 5
    %v661 = vrot.slane %v660, 4
    %v662 = vrot.slane %v55, 5
    %v663 = vsel %vm639, %v661, %v662
    %v664 = vrot.slane %v595, 5
    %v665 = vrot.slane %v664, 4
    %v666 = vrot.slane %v56, 5
    %v667 = vsel %vm639, %v665, %v666
    %v668 = vrot.slane %v596, 5
    %v669 = vrot.slane %v668, 4
    %v670 = vrot.slane %v57, 5
    %v671 = vsel %vm639, %v669, %v670
    %v672 = vrot.slane %v597, 5
    %v673 = vrot.slane %v672, 4
    %v674 = vrot.slane %v58, 5
    %v675 = vsel %vm639, %v673, %v674
    %v676 = vrot.slane %v598, 5
    %v677 = vrot.slane %v676, 4
    %v678 = vrot.slane %v59, 5
    %v679 = vsel %vm639, %v677, %v678
    %v680 = vrot.slane %v599, 5
    %v681 = vrot.slane %v680, 4
    %v682 = vrot.slane %v60, 5
    %v683 = vsel %vm639, %v681, %v682
    %v684 = vrot.slane %v600, 5
    %v685 = vrot.slane %v684, 4
    %v686 = vrot.slane %v61, 5
    %v687 = vsel %vm639, %v685, %v686
    %v688 = vrot.slane %v601, 5
    %v689 = vrot.slane %v688, 4
    %v690 = vrot.slane %v62, 5
    %v691 = vsel %vm639, %v689, %v690
    %v692 = vrot.slane %v602, 5
    %v693 = vrot.slane %v692, 4
    %v694 = vrot.slane %v63, 5
    %v695 = vsel %vm639, %v693, %v694
    %v696 = vrot.slane %v603, 5
    %v697 = vrot.slane %v696, 4
    %v698 = vrot.slane %v64, 5
    %v699 = vsel %vm639, %v697, %v698
    %v700 = vrot.slane %v604, 5
    %v701 = vrot.slane %v700, 4
    %v702 = vrot.slane %v65, 5
    %v703 = vsel %vm639, %v701, %v702
    %s704 = scalar_lea.vmem %s1, 96
    %v705 = vld [vmem:[%s704] sm:$0xf]
    %v706 = vld [vmem:[%s704 + $0x4] sm:$0xf]
    %v707 = vld [vmem:[%s704 + $0x8] sm:$0xf]
    %v708 = vld [vmem:[%s704 + $0xc] sm:$0xf]
    %v709 = vld [vmem:[%s704 + $0x10] sm:$0xf]
    %v710 = vld [vmem:[%s704 + $0x14] sm:$0xf]
    %v711 = vld [vmem:[%s704 + $0x18] sm:$0xf]
    %v712 = vld [vmem:[%s704 + $0x1c] sm:$0xf]
    %v713 = vld [vmem:[%s704 + $0x20] sm:$0xf]
    %v714 = vld [vmem:[%s704 + $0x24] sm:$0xf]
    %v715 = vld [vmem:[%s704 + $0x28] sm:$0xf]
    %v716 = vld [vmem:[%s704 + $0x2c] sm:$0xf]
    %v717 = vunpack.c.l.b16 %v643
    %v718 = vunpack.c.l.b16 %v647
    %v719 = vunpack.c.l.b16 %v651
    %v720 = vunpack.c.l.b16 %v655
    %v721 = vunpack.c.l.b16 %v659
    %v722 = vunpack.c.l.b16 %v663
    %v723 = vunpack.c.l.b16 %v667
    %v724 = vunpack.c.l.b16 %v671
    %v725 = vunpack.c.l.b16 %v675
    %v726 = vunpack.c.l.b16 %v679
    %v727 = vunpack.c.l.b16 %v683
    %v728 = vunpack.c.l.b16 %v687
    %v729 = vunpack.c.l.b16 %v691
    %v730 = vunpack.c.l.b16 %v695
    %v731 = vunpack.c.l.b16 %v699
    %v732 = vunpack.c.l.b16 %v703
    %v733 = vpack.c.b16 %v718, %v717
    %v734 = vpack.c.b16 %v720, %v719
    %v735 = vpack.c.b16 %v722, %v721
    %v736 = vpack.c.b16 %v724, %v723
    %v737 = vpack.c.b16 %v726, %v725
    %v738 = vpack.c.b16 %v728, %v727
    %v739 = vpack.c.b16 %v730, %v729
    %v740 = vpack.c.b16 %v732, %v731
    %v753 = vunpack.c.l.b16 %v705
    %v754 = vunpack.c.l.b16 %v706
    %v755 = vunpack.c.l.b16 %v707
    %v756 = vunpack.c.l.b16 %v708
    %v757 = vunpack.c.l.b16 %v709
    %v758 = vunpack.c.l.b16 %v710
    %v759 = vunpack.c.l.b16 %v711
    %v760 = vunpack.c.l.b16 %v712
    %v761 = vunpack.c.l.b16 %v713
    %v762 = vunpack.c.l.b16 %v714
    %v763 = vunpack.c.l.b16 %v715
    %v764 = vunpack.c.l.b16 %v716
    %v765 = vpack.c.b16 %v754, %v753
    %v766 = vpack.c.b16 %v756, %v755
    %v767 = vpack.c.b16 %v758, %v757
    %v768 = vpack.c.b16 %v760, %v759
    %v769 = vpack.c.b16 %v762, %v761
    %v770 = vpack.c.b16 %v764, %v763
    %v778 = vsel %vm366, %v733, 0
    %v781 = vsel %vm366, %v734, 0
    %v784 = vsel %vm366, %v735, 0
    %v787 = vsel %vm366, %v736, 0
    %v790 = vsel %vm366, %v737, 0
    %v793 = vsel %vm366, %v738, 0
    %v796 = vsel %vm366, %v739, 0
    %v799 = vsel %vm366, %v740, 0
    %801 = vmatpush.bf16.msra.mxu0 0
    %802 = vmatpush.bf16.msra.mxu0 0
    %803 = vmatpush.bf16.msra.mxu0 %v770
    %804 = vmatpush.bf16.msra.mxu0 %v769
    %805 = vmatpush.bf16.msra.mxu0 %v768
    %806 = vmatpush.bf16.msra.mxu0 %v767
    %807 = vmatpush.bf16.msra.mxu0 %v766
    %808 = vmatpush.bf16.msra.mxu0 %v765
    %809 = vmatmul.bf16.gmra.mxu0 %v778
    %v810 = vpop.f32.mrf.mxu0
    %v811 = vadd.f32 0.0, %v810
    %v812 = vpop.f32.mrf.mxu0
    %v813 = vadd.f32 0.0, %v812
    %814 = vmatmul.bf16.gmra.mxu0 %v781
    %v815 = vpop.f32.mrf.mxu0
    %v816 = vadd.f32 0.0, %v815
    %v817 = vpop.f32.mrf.mxu0
    %v818 = vadd.f32 0.0, %v817
    %819 = vmatmul.bf16.gmra.mxu0 %v784
    %v820 = vpop.f32.mrf.mxu0
    %v821 = vadd.f32 0.0, %v820
    %v822 = vpop.f32.mrf.mxu0
    %v823 = vadd.f32 0.0, %v822
    %824 = vmatmul.bf16.gmra.mxu0 %v787
    %v825 = vpop.f32.mrf.mxu0
    %v826 = vadd.f32 0.0, %v825
    %v827 = vpop.f32.mrf.mxu0
    %v828 = vadd.f32 0.0, %v827
    %829 = vmatmul.bf16.gmra.mxu0 %v790
    %v830 = vpop.f32.mrf.mxu0
    %v831 = vadd.f32 0.0, %v830
    %v832 = vpop.f32.mrf.mxu0
    %v833 = vadd.f32 0.0, %v832
    %834 = vmatmul.bf16.gmra.mxu0 %v793
    %v835 = vpop.f32.mrf.mxu0
    %v836 = vadd.f32 0.0, %v835
    %v837 = vpop.f32.mrf.mxu0
    %v838 = vadd.f32 0.0, %v837
    %839 = vmatmul.bf16.gmra.mxu0 %v796
    %v840 = vpop.f32.mrf.mxu0
    %v841 = vadd.f32 0.0, %v840
    %v842 = vpop.f32.mrf.mxu0
    %v843 = vadd.f32 0.0, %v842
    %844 = vmatmul.bf16.gmra.mxu0 %v799
    %v845 = vpop.f32.mrf.mxu0
    %v846 = vadd.f32 0.0, %v845
    %v847 = vpop.f32.mrf.mxu0
    %v848 = vadd.f32 0.0, %v847
    %849 = vdwg.mxu0
    %v850 = vadd.f32 %v550, %v811
    %v851 = vadd.f32 %v552, %v813
    %v852 = vadd.f32 %v555, %v816
    %v853 = vadd.f32 %v557, %v818
    %v854 = vadd.f32 %v560, %v821
    %v855 = vadd.f32 %v562, %v823
    %v856 = vadd.f32 %v565, %v826
    %v857 = vadd.f32 %v567, %v828
    %v858 = vadd.f32 %v570, %v831
    %v859 = vadd.f32 %v572, %v833
    %v860 = vadd.f32 %v575, %v836
    %v861 = vadd.f32 %v577, %v838
    %v862 = vadd.f32 %v580, %v841
    %v863 = vadd.f32 %v582, %v843
    %v864 = vadd.f32 %v585, %v846
    %v865 = vadd.f32 %v587, %v848
    %v866 = vld [vmem:[%s2] sm:$0x1]
    %v868 = vperm.slane %v866, 0
    %v870 = vadd.f32 %v850, %v868
    %v871 = vadd.f32 %v851, %v868
    %v872 = vadd.f32 %v852, %v868
    %v873 = vadd.f32 %v853, %v868
    %v874 = vadd.f32 %v854, %v868
    %v875 = vadd.f32 %v855, %v868
    %v876 = vadd.f32 %v856, %v868
    %v877 = vadd.f32 %v857, %v868
    %v878 = vadd.f32 %v858, %v868
    %v879 = vadd.f32 %v859, %v868
    %v880 = vadd.f32 %v860, %v868
    %v881 = vadd.f32 %v861, %v868
    %v882 = vadd.f32 %v862, %v868
    %v883 = vadd.f32 %v863, %v868
    %v884 = vadd.f32 %v864, %v868
    %v885 = vadd.f32 %v865, %v868
    %v886 = vmax.f32 %v870, 0.0
    %v887 = vmax.f32 %v871, 0.0
    %v888 = vmax.f32 %v872, 0.0
    %v889 = vmax.f32 %v873, 0.0
    %v890 = vmax.f32 %v874, 0.0
    %v891 = vmax.f32 %v875, 0.0
    %v892 = vmax.f32 %v876, 0.0
    %v893 = vmax.f32 %v877, 0.0
    %v894 = vmax.f32 %v878, 0.0
    %v895 = vmax.f32 %v879, 0.0
    %v896 = vmax.f32 %v880, 0.0
    %v897 = vmax.f32 %v881, 0.0
    %v898 = vmax.f32 %v882, 0.0
    %v899 = vmax.f32 %v883, 0.0
    %v900 = vmax.f32 %v884, 0.0
    %v901 = vmax.f32 %v885, 0.0
    %v902 = vpack.c.bf16 %v887, %v886
    %v903 = vpack.c.bf16 %v889, %v888
    %v904 = vpack.c.bf16 %v891, %v890
    %v905 = vpack.c.bf16 %v893, %v892
    %v906 = vpack.c.bf16 %v895, %v894
    %v907 = vpack.c.bf16 %v897, %v896
    %v908 = vpack.c.bf16 %v899, %v898
    %v909 = vpack.c.bf16 %v901, %v900
    %v910 = vld [vmem:[%s3] sm:$0xf]
    %v911 = vld [vmem:[%s3 + $0x4] sm:$0xf]
    %v912 = vld [vmem:[%s3 + $0x8] sm:$0xf]
    %v913 = vld [vmem:[%s3 + $0xc] sm:$0xf]
    %v914 = vld [vmem:[%s4] sm:$0x1]
    %v916 = vperm.slane %v914, 0
    %v922 = vunpack.c.l.b16 %v910
    %v923 = vunpack.c.l.b16 %v911
    %v924 = vunpack.c.l.b16 %v912
    %v925 = vunpack.c.l.b16 %v913
    %v926 = vpack.c.b16 %v923, %v922
    %v927 = vpack.c.b16 %v925, %v924
    %vm930 = vcmask 261120
    %v932 = vsel %vm930, %v902, 0
    %v935 = vsel %vm930, %v903, 0
    %v938 = vsel %vm930, %v904, 0
    %v941 = vsel %vm930, %v905, 0
    %v944 = vsel %vm930, %v906, 0
    %v947 = vsel %vm930, %v907, 0
    %v950 = vsel %vm930, %v908, 0
    %v953 = vsel %vm930, %v909, 0
    %955 = vmatpush.bf16.msra.mxu0 0
    %956 = vmatpush.bf16.msra.mxu0 0
    %957 = vmatpush.bf16.msra.mxu0 0
    %958 = vmatpush.bf16.msra.mxu0 0
    %959 = vmatpush.bf16.msra.mxu0 0
    %960 = vmatpush.bf16.msra.mxu0 0
    %961 = vmatpush.bf16.msra.mxu0 %v927
    %962 = vmatpush.bf16.msra.mxu0 %v926
    %963 = vmatmul.bf16.gmra.mxu0 %v932
    %v964 = vpop.f32.mrf.mxu0
    %v965 = vadd.f32 %v916, %v964
    %v966 = vpop.f32.mrf.mxu0
    %v967 = vadd.f32 %v916, %v966
    %968 = vmatmul.bf16.gmra.mxu0 %v935
    %v969 = vpop.f32.mrf.mxu0
    %v970 = vadd.f32 %v916, %v969
    %v971 = vpop.f32.mrf.mxu0
    %v972 = vadd.f32 %v916, %v971
    %973 = vmatmul.bf16.gmra.mxu0 %v938
    %v974 = vpop.f32.mrf.mxu0
    %v975 = vadd.f32 %v916, %v974
    %v976 = vpop.f32.mrf.mxu0
    %v977 = vadd.f32 %v916, %v976
    %978 = vmatmul.bf16.gmra.mxu0 %v941
    %v979 = vpop.f32.mrf.mxu0
    %v980 = vadd.f32 %v916, %v979
    %v981 = vpop.f32.mrf.mxu0
    %v982 = vadd.f32 %v916, %v981
    %983 = vmatmul.bf16.gmra.mxu0 %v944
    %v984 = vpop.f32.mrf.mxu0
    %v985 = vadd.f32 %v916, %v984
    %v986 = vpop.f32.mrf.mxu0
    %v987 = vadd.f32 %v916, %v986
    %988 = vmatmul.bf16.gmra.mxu0 %v947
    %v989 = vpop.f32.mrf.mxu0
    %v990 = vadd.f32 %v916, %v989
    %v991 = vpop.f32.mrf.mxu0
    %v992 = vadd.f32 %v916, %v991
    %993 = vmatmul.bf16.gmra.mxu0 %v950
    %v994 = vpop.f32.mrf.mxu0
    %v995 = vadd.f32 %v916, %v994
    %v996 = vpop.f32.mrf.mxu0
    %v997 = vadd.f32 %v916, %v996
    %998 = vmatmul.bf16.gmra.mxu0 %v953
    %v999 = vpop.f32.mrf.mxu0
    %v1000 = vadd.f32 %v916, %v999
    %v1001 = vpop.f32.mrf.mxu0
    %v1002 = vadd.f32 %v916, %v1001
    %1003 = vdwg.mxu0
    %v1004 = vlaneseq
    %v1005 = vand.u32 %v1004, 127
    %vm1006 = vcmp.ge.s32.totalorder %v1005, 54
    %vm1007 = vcmp.lt.s32.totalorder %v1005, 63
    %vm1008 = vmand %vm1006, %vm1007
    %v1009 = vxor.u32 %v965, 2147483648
    %v1010 = vxor.u32 %v967, 2147483648
    %v1011 = vxor.u32 %v970, 2147483648
    %v1012 = vxor.u32 %v972, 2147483648
    %v1013 = vxor.u32 %v975, 2147483648
    %v1014 = vxor.u32 %v977, 2147483648
    %v1015 = vxor.u32 %v980, 2147483648
    %v1016 = vxor.u32 %v982, 2147483648
    %v1017 = vxor.u32 %v985, 2147483648
    %v1018 = vxor.u32 %v987, 2147483648
    %v1019 = vxor.u32 %v990, 2147483648
    %v1020 = vxor.u32 %v992, 2147483648
    %v1021 = vxor.u32 %v995, 2147483648
    %v1022 = vxor.u32 %v997, 2147483648
    %v1023 = vxor.u32 %v1000, 2147483648
    %v1024 = vxor.u32 %v1002, 2147483648
    %v1025 = vmul.f32 %v1009, 1.442695
    %v1026 = vpow.pop %v1025
    %v1027 = vmul.f32 %v1010, 1.442695
    %v1028 = vpow.pop %v1027
    %v1029 = vmul.f32 %v1011, 1.442695
    %v1030 = vpow.pop %v1029
    %v1031 = vmul.f32 %v1012, 1.442695
    %v1032 = vpow.pop %v1031
    %v1033 = vmul.f32 %v1013, 1.442695
    %v1034 = vpow.pop %v1033
    %v1035 = vmul.f32 %v1014, 1.442695
    %v1036 = vpow.pop %v1035
    %v1037 = vmul.f32 %v1015, 1.442695
    %v1038 = vpow.pop %v1037
    %v1039 = vmul.f32 %v1016, 1.442695
    %v1040 = vpow.pop %v1039
    %v1041 = vmul.f32 %v1017, 1.442695
    %v1042 = vpow.pop %v1041
    %v1043 = vmul.f32 %v1018, 1.442695
    %v1044 = vpow.pop %v1043
    %v1045 = vmul.f32 %v1019, 1.442695
    %v1046 = vpow.pop %v1045
    %v1047 = vmul.f32 %v1020, 1.442695
    %v1048 = vpow.pop %v1047
    %v1049 = vmul.f32 %v1021, 1.442695
    %v1050 = vpow.pop %v1049
    %v1051 = vmul.f32 %v1022, 1.442695
    %v1052 = vpow.pop %v1051
    %v1053 = vmul.f32 %v1023, 1.442695
    %v1054 = vpow.pop %v1053
    %v1055 = vmul.f32 %v1024, 1.442695
    %v1056 = vpow.pop %v1055
    %v1057 = vadd.f32 %v1026, 1.0
    %v1058 = vadd.f32 %v1028, 1.0
    %v1059 = vadd.f32 %v1030, 1.0
    %v1060 = vadd.f32 %v1032, 1.0
    %v1061 = vadd.f32 %v1034, 1.0
    %v1062 = vadd.f32 %v1036, 1.0
    %v1063 = vadd.f32 %v1038, 1.0
    %v1064 = vadd.f32 %v1040, 1.0
    %v1065 = vadd.f32 %v1042, 1.0
    %v1066 = vadd.f32 %v1044, 1.0
    %v1067 = vadd.f32 %v1046, 1.0
    %v1068 = vadd.f32 %v1048, 1.0
    %v1069 = vadd.f32 %v1050, 1.0
    %v1070 = vadd.f32 %v1052, 1.0
    %v1071 = vadd.f32 %v1054, 1.0
    %v1072 = vadd.f32 %v1056, 1.0
    %v1073 = vrcp.pop %v1057
    %v1074 = vmul.f32 %v1057, %v1073
    %v1075 = vsub.f32 1.0, %v1074
    %v1076 = vmul.f32 %v1073, %v1075
    %v1077 = vadd.f32 %v1073, %v1076
    %vm1078 = vweird.f32 %v1057
    %vm1079 = vweird.f32 %v1073
    %vm1080 = vmor %vm1078, %vm1079
    %v1081 = vsel %vm1080, %v1073, %v1077
    %v1082 = vand.u32 2147483647, %v1057
    %vm1083 = vcmp.eq.f32.partialorder %v1082, 8.507059e+37
    %v1084 = vand.u32 %v1057, 2147483648
    %v1085 = vor.u32 1.1754944e-38, %v1084
    %v1086 = vsel %vm1083, %v1085, %v1081
    %v1087 = vmul.f32 1.0, %v1086
    %v1088 = vrcp.pop %v1058
    %v1089 = vmul.f32 %v1058, %v1088
    %v1090 = vsub.f32 1.0, %v1089
    %v1091 = vmul.f32 %v1088, %v1090
    %v1092 = vadd.f32 %v1088, %v1091
    %vm1093 = vweird.f32 %v1058
    %vm1094 = vweird.f32 %v1088
    %vm1095 = vmor %vm1093, %vm1094
    %v1096 = vsel %vm1095, %v1088, %v1092
    %v1097 = vand.u32 2147483647, %v1058
    %vm1098 = vcmp.eq.f32.partialorder %v1097, 8.507059e+37
    %v1099 = vand.u32 %v1058, 2147483648
    %v1100 = vor.u32 1.1754944e-38, %v1099
    %v1101 = vsel %vm1098, %v1100, %v1096
    %v1102 = vmul.f32 1.0, %v1101
    %v1103 = vrcp.pop %v1059
    %v1104 = vmul.f32 %v1059, %v1103
    %v1105 = vsub.f32 1.0, %v1104
    %v1106 = vmul.f32 %v1103, %v1105
    %v1107 = vadd.f32 %v1103, %v1106
    %vm1108 = vweird.f32 %v1059
    %vm1109 = vweird.f32 %v1103
    %vm1110 = vmor %vm1108, %vm1109
    %v1111 = vsel %vm1110, %v1103, %v1107
    %v1112 = vand.u32 2147483647, %v1059
    %vm1113 = vcmp.eq.f32.partialorder %v1112, 8.507059e+37
    %v1114 = vand.u32 %v1059, 2147483648
    %v1115 = vor.u32 1.1754944e-38, %v1114
    %v1116 = vsel %vm1113, %v1115, %v1111
    %v1117 = vmul.f32 1.0, %v1116
    %v1118 = vrcp.pop %v1060
    %v1119 = vmul.f32 %v1060, %v1118
    %v1120 = vsub.f32 1.0, %v1119
    %v1121 = vmul.f32 %v1118, %v1120
    %v1122 = vadd.f32 %v1118, %v1121
    %vm1123 = vweird.f32 %v1060
    %vm1124 = vweird.f32 %v1118
    %vm1125 = vmor %vm1123, %vm1124
    %v1126 = vsel %vm1125, %v1118, %v1122
    %v1127 = vand.u32 2147483647, %v1060
    %vm1128 = vcmp.eq.f32.partialorder %v1127, 8.507059e+37
    %v1129 = vand.u32 %v1060, 2147483648
    %v1130 = vor.u32 1.1754944e-38, %v1129
    %v1131 = vsel %vm1128, %v1130, %v1126
    %v1132 = vmul.f32 1.0, %v1131
    %v1133 = vrcp.pop %v1061
    %v1134 = vmul.f32 %v1061, %v1133
    %v1135 = vsub.f32 1.0, %v1134
    %v1136 = vmul.f32 %v1133, %v1135
    %v1137 = vadd.f32 %v1133, %v1136
    %vm1138 = vweird.f32 %v1061
    %vm1139 = vweird.f32 %v1133
    %vm1140 = vmor %vm1138, %vm1139
    %v1141 = vsel %vm1140, %v1133, %v1137
    %v1142 = vand.u32 2147483647, %v1061
    %vm1143 = vcmp.eq.f32.partialorder %v1142, 8.507059e+37
    %v1144 = vand.u32 %v1061, 2147483648
    %v1145 = vor.u32 1.1754944e-38, %v1144
    %v1146 = vsel %vm1143, %v1145, %v1141
    %v1147 = vmul.f32 1.0, %v1146
    %v1148 = vrcp.pop %v1062
    %v1149 = vmul.f32 %v1062, %v1148
    %v1150 = vsub.f32 1.0, %v1149
    %v1151 = vmul.f32 %v1148, %v1150
    %v1152 = vadd.f32 %v1148, %v1151
    %vm1153 = vweird.f32 %v1062
    %vm1154 = vweird.f32 %v1148
    %vm1155 = vmor %vm1153, %vm1154
    %v1156 = vsel %vm1155, %v1148, %v1152
    %v1157 = vand.u32 2147483647, %v1062
    %vm1158 = vcmp.eq.f32.partialorder %v1157, 8.507059e+37
    %v1159 = vand.u32 %v1062, 2147483648
    %v1160 = vor.u32 1.1754944e-38, %v1159
    %v1161 = vsel %vm1158, %v1160, %v1156
    %v1162 = vmul.f32 1.0, %v1161
    %v1163 = vrcp.pop %v1063
    %v1164 = vmul.f32 %v1063, %v1163
    %v1165 = vsub.f32 1.0, %v1164
    %v1166 = vmul.f32 %v1163, %v1165
    %v1167 = vadd.f32 %v1163, %v1166
    %vm1168 = vweird.f32 %v1063
    %vm1169 = vweird.f32 %v1163
    %vm1170 = vmor %vm1168, %vm1169
    %v1171 = vsel %vm1170, %v1163, %v1167
    %v1172 = vand.u32 2147483647, %v1063
    %vm1173 = vcmp.eq.f32.partialorder %v1172, 8.507059e+37
    %v1174 = vand.u32 %v1063, 2147483648
    %v1175 = vor.u32 1.1754944e-38, %v1174
    %v1176 = vsel %vm1173, %v1175, %v1171
    %v1177 = vmul.f32 1.0, %v1176
    %v1178 = vrcp.pop %v1064
    %v1179 = vmul.f32 %v1064, %v1178
    %v1180 = vsub.f32 1.0, %v1179
    %v1181 = vmul.f32 %v1178, %v1180
    %v1182 = vadd.f32 %v1178, %v1181
    %vm1183 = vweird.f32 %v1064
    %vm1184 = vweird.f32 %v1178
    %vm1185 = vmor %vm1183, %vm1184
    %v1186 = vsel %vm1185, %v1178, %v1182
    %v1187 = vand.u32 2147483647, %v1064
    %vm1188 = vcmp.eq.f32.partialorder %v1187, 8.507059e+37
    %v1189 = vand.u32 %v1064, 2147483648
    %v1190 = vor.u32 1.1754944e-38, %v1189
    %v1191 = vsel %vm1188, %v1190, %v1186
    %v1192 = vmul.f32 1.0, %v1191
    %v1193 = vrcp.pop %v1065
    %v1194 = vmul.f32 %v1065, %v1193
    %v1195 = vsub.f32 1.0, %v1194
    %v1196 = vmul.f32 %v1193, %v1195
    %v1197 = vadd.f32 %v1193, %v1196
    %vm1198 = vweird.f32 %v1065
    %vm1199 = vweird.f32 %v1193
    %vm1200 = vmor %vm1198, %vm1199
    %v1201 = vsel %vm1200, %v1193, %v1197
    %v1202 = vand.u32 2147483647, %v1065
    %vm1203 = vcmp.eq.f32.partialorder %v1202, 8.507059e+37
    %v1204 = vand.u32 %v1065, 2147483648
    %v1205 = vor.u32 1.1754944e-38, %v1204
    %v1206 = vsel %vm1203, %v1205, %v1201
    %v1207 = vmul.f32 1.0, %v1206
    %v1208 = vrcp.pop %v1066
    %v1209 = vmul.f32 %v1066, %v1208
    %v1210 = vsub.f32 1.0, %v1209
    %v1211 = vmul.f32 %v1208, %v1210
    %v1212 = vadd.f32 %v1208, %v1211
    %vm1213 = vweird.f32 %v1066
    %vm1214 = vweird.f32 %v1208
    %vm1215 = vmor %vm1213, %vm1214
    %v1216 = vsel %vm1215, %v1208, %v1212
    %v1217 = vand.u32 2147483647, %v1066
    %vm1218 = vcmp.eq.f32.partialorder %v1217, 8.507059e+37
    %v1219 = vand.u32 %v1066, 2147483648
    %v1220 = vor.u32 1.1754944e-38, %v1219
    %v1221 = vsel %vm1218, %v1220, %v1216
    %v1222 = vmul.f32 1.0, %v1221
    %v1223 = vrcp.pop %v1067
    %v1224 = vmul.f32 %v1067, %v1223
    %v1225 = vsub.f32 1.0, %v1224
    %v1226 = vmul.f32 %v1223, %v1225
    %v1227 = vadd.f32 %v1223, %v1226
    %vm1228 = vweird.f32 %v1067
    %vm1229 = vweird.f32 %v1223
    %vm1230 = vmor %vm1228, %vm1229
    %v1231 = vsel %vm1230, %v1223, %v1227
    %v1232 = vand.u32 2147483647, %v1067
    %vm1233 = vcmp.eq.f32.partialorder %v1232, 8.507059e+37
    %v1234 = vand.u32 %v1067, 2147483648
    %v1235 = vor.u32 1.1754944e-38, %v1234
    %v1236 = vsel %vm1233, %v1235, %v1231
    %v1237 = vmul.f32 1.0, %v1236
    %v1238 = vrcp.pop %v1068
    %v1239 = vmul.f32 %v1068, %v1238
    %v1240 = vsub.f32 1.0, %v1239
    %v1241 = vmul.f32 %v1238, %v1240
    %v1242 = vadd.f32 %v1238, %v1241
    %vm1243 = vweird.f32 %v1068
    %vm1244 = vweird.f32 %v1238
    %vm1245 = vmor %vm1243, %vm1244
    %v1246 = vsel %vm1245, %v1238, %v1242
    %v1247 = vand.u32 2147483647, %v1068
    %vm1248 = vcmp.eq.f32.partialorder %v1247, 8.507059e+37
    %v1249 = vand.u32 %v1068, 2147483648
    %v1250 = vor.u32 1.1754944e-38, %v1249
    %v1251 = vsel %vm1248, %v1250, %v1246
    %v1252 = vmul.f32 1.0, %v1251
    %v1253 = vrcp.pop %v1069
    %v1254 = vmul.f32 %v1069, %v1253
    %v1255 = vsub.f32 1.0, %v1254
    %v1256 = vmul.f32 %v1253, %v1255
    %v1257 = vadd.f32 %v1253, %v1256
    %vm1258 = vweird.f32 %v1069
    %vm1259 = vweird.f32 %v1253
    %vm1260 = vmor %vm1258, %vm1259
    %v1261 = vsel %vm1260, %v1253, %v1257
    %v1262 = vand.u32 2147483647, %v1069
    %vm1263 = vcmp.eq.f32.partialorder %v1262, 8.507059e+37
    %v1264 = vand.u32 %v1069, 2147483648
    %v1265 = vor.u32 1.1754944e-38, %v1264
    %v1266 = vsel %vm1263, %v1265, %v1261
    %v1267 = vmul.f32 1.0, %v1266
    %v1268 = vrcp.pop %v1070
    %v1269 = vmul.f32 %v1070, %v1268
    %v1270 = vsub.f32 1.0, %v1269
    %v1271 = vmul.f32 %v1268, %v1270
    %v1272 = vadd.f32 %v1268, %v1271
    %vm1273 = vweird.f32 %v1070
    %vm1274 = vweird.f32 %v1268
    %vm1275 = vmor %vm1273, %vm1274
    %v1276 = vsel %vm1275, %v1268, %v1272
    %v1277 = vand.u32 2147483647, %v1070
    %vm1278 = vcmp.eq.f32.partialorder %v1277, 8.507059e+37
    %v1279 = vand.u32 %v1070, 2147483648
    %v1280 = vor.u32 1.1754944e-38, %v1279
    %v1281 = vsel %vm1278, %v1280, %v1276
    %v1282 = vmul.f32 1.0, %v1281
    %v1283 = vrcp.pop %v1071
    %v1284 = vmul.f32 %v1071, %v1283
    %v1285 = vsub.f32 1.0, %v1284
    %v1286 = vmul.f32 %v1283, %v1285
    %v1287 = vadd.f32 %v1283, %v1286
    %vm1288 = vweird.f32 %v1071
    %vm1289 = vweird.f32 %v1283
    %vm1290 = vmor %vm1288, %vm1289
    %v1291 = vsel %vm1290, %v1283, %v1287
    %v1292 = vand.u32 2147483647, %v1071
    %vm1293 = vcmp.eq.f32.partialorder %v1292, 8.507059e+37
    %v1294 = vand.u32 %v1071, 2147483648
    %v1295 = vor.u32 1.1754944e-38, %v1294
    %v1296 = vsel %vm1293, %v1295, %v1291
    %v1297 = vmul.f32 1.0, %v1296
    %v1298 = vrcp.pop %v1072
    %v1299 = vmul.f32 %v1072, %v1298
    %v1300 = vsub.f32 1.0, %v1299
    %v1301 = vmul.f32 %v1298, %v1300
    %v1302 = vadd.f32 %v1298, %v1301
    %vm1303 = vweird.f32 %v1072
    %vm1304 = vweird.f32 %v1298
    %vm1305 = vmor %vm1303, %vm1304
    %v1306 = vsel %vm1305, %v1298, %v1302
    %v1307 = vand.u32 2147483647, %v1072
    %vm1308 = vcmp.eq.f32.partialorder %v1307, 8.507059e+37
    %v1309 = vand.u32 %v1072, 2147483648
    %v1310 = vor.u32 1.1754944e-38, %v1309
    %v1311 = vsel %vm1308, %v1310, %v1306
    %v1312 = vmul.f32 1.0, %v1311
    %v1313 = vsel %vm1008, %v1087, %v965
    %v1314 = vsel %vm1008, %v1102, %v967
    %v1315 = vsel %vm1008, %v1117, %v970
    %v1316 = vsel %vm1008, %v1132, %v972
    %v1317 = vsel %vm1008, %v1147, %v975
    %v1318 = vsel %vm1008, %v1162, %v977
    %v1319 = vsel %vm1008, %v1177, %v980
    %v1320 = vsel %vm1008, %v1192, %v982
    %v1321 = vsel %vm1008, %v1207, %v985
    %v1322 = vsel %vm1008, %v1222, %v987
    %v1323 = vsel %vm1008, %v1237, %v990
    %v1324 = vsel %vm1008, %v1252, %v992
    %v1325 = vsel %vm1008, %v1267, %v995
    %v1326 = vsel %vm1008, %v1282, %v997
    %v1327 = vsel %vm1008, %v1297, %v1000
    %v1328 = vsel %vm1008, %v1312, %v1002
    %1329 = vst [vmem:[#allocation2] sm:$0xff] %v1313
    %1330 = vst [vmem:[#allocation2 + $0x8] sm:$0xff] %v1314
    %1331 = vst [vmem:[#allocation2 + $0x10] sm:$0xff] %v1315
    %1332 = vst [vmem:[#allocation2 + $0x18] sm:$0xff] %v1316
    %1333 = vst [vmem:[#allocation2 + $0x20] sm:$0xff] %v1317
    %1334 = vst [vmem:[#allocation2 + $0x28] sm:$0xff] %v1318
    %1335 = vst [vmem:[#allocation2 + $0x30] sm:$0xff] %v1319
    %1336 = vst [vmem:[#allocation2 + $0x38] sm:$0xff] %v1320
    %1337 = vst [vmem:[#allocation2 + $0x40] sm:$0xff] %v1321
    %1338 = vst [vmem:[#allocation2 + $0x48] sm:$0xff] %v1322
    %1339 = vst [vmem:[#allocation2 + $0x50] sm:$0xff] %v1323
    %1340 = vst [vmem:[#allocation2 + $0x58] sm:$0xff] %v1324
    %1341 = vst [vmem:[#allocation2 + $0x60] sm:$0xff] %v1325
    %1342 = vst [vmem:[#allocation2 + $0x68] sm:$0xff] %v1326
    %1343 = vst [vmem:[#allocation2 + $0x70] sm:$0xff] %v1327
    %1344 = vst [vmem:[#allocation2 + $0x78] sm:$0xff] %v1328
    // Predicated region
    $region22: #{tpu_custom_call.1} parent=1 // pred_check
      _
    $region23: #{tpu_custom_call.1} parent=1 // pred_check_branch
      %1346 = sbr.rel (0) target = $region25
    $region24: #{tpu_custom_call.1} parent=1 // pred_region
      %1348 = vsyncadd [#allocation3], 0
      %s1349 = sshll.u32 [#allocation2], 4
      %s1350 = int_to_ptr.vmem [resolvable:$true] %s1349
      %s1351 = sshll.u32 %s5, 4
      %s1352 = int_to_ptr.hbm [resolvable:$true] %s1351
      %1357 = dma.vmem_to_hbm [thread:$0]  %s1350, 2048, %s1352, [#allocation3], 128, 128, 8
    $region25: #{tpu_custom_call.1} parent=1 // pred_fallthru
      _
    // Predicated region
    $region26: #{tpu_custom_call.1} parent=1 // pred_check
      _
    $region27: #{tpu_custom_call.1} parent=1 // pred_check_branch
      %1359 = sbr.rel (0) target = $region29
    $region28: #{tpu_custom_call.1} parent=1 // pred_region
      %1361 = dma.done [#allocation3], 2048
    $region29: #{tpu_custom_call.1} parent=1 // pred_fallthru
      _
    %1362 = vsyncpa [#allocation3], 1

// kernel: tpu_custom_call.1
$region0: #{tpu_custom_call.1}
  #allocation0 [shape = 'u32[]', space=smem, size = 0x4, offset = 0x4, fixed_abs, tag = 'smem constant byte address 0x4 - core index']
  #allocation1 [shape = 'u32[72,128]{1,0:T(1,128)}', space=vmem, size = 0x9000, scoped, tag = 'internal scratch']
  %s0 = inlined_call_operand.vmem [shape: bf16[16,10,96], index: 0, kind: input, shape index: {}]
  %s1 = inlined_call_operand.vmem [shape: bf16[3,96,32], index: 1, kind: input, shape index: {}]
  %s2 = inlined_call_operand.vmem [shape: f32[1,32], index: 2, kind: input, shape index: {}]
  %s3 = inlined_call_operand.vmem [shape: bf16[32,128], index: 3, kind: input, shape index: {}]
  %s4 = inlined_call_operand.vmem [shape: f32[1,128], index: 4, kind: input, shape index: {}]
  %s5 = inlined_call_operand.hbm [shape: f32[128,128], index: 5, kind: output, shape index: {}]
  %s6 = sld [smem:[#allocation0]]
  $region30: #{tpu_custom_call.1} parent=0
    _
  %s8 = ssub.s32 1, %s6
  %s9 = scalar_select 0, %s8, %s6
  $region1: #{tpu_custom_call.1} parent=0
    #allocation2 [shape = 'u8[65536]{0}', space=vmem, size = 0x10000, scoped, tag = 'output window, operand 0, single buffered']
    #allocation3 [shape = 's32[1]{0}', space=sflag, size = 0x4, scoped, tag = 'scoped memory for tpu_custom_call.1']
    %10 = vsyncpa [#allocation3], 0
    // Predicated region
    $region2: #{tpu_custom_call.1} parent=1 // pred_check
      _
    $region3: #{tpu_custom_call.1} parent=1 // pred_check_branch
      %12 = sbr.rel (0) target = $region5
    $region4: #{tpu_custom_call.1} parent=1 // pred_region
      _
    $region5: #{tpu_custom_call.1} parent=1 // pred_fallthru
      _
    // Predicated region
    $region6: #{tpu_custom_call.1} parent=1 // pred_check
      _
    $region7: #{tpu_custom_call.1} parent=1 // pred_check_branch
      %14 = sbr.rel (0) target = $region9
    $region8: #{tpu_custom_call.1} parent=1 // pred_region
      _
    $region9: #{tpu_custom_call.1} parent=1 // pred_fallthru
      _
    // Predicated region
    $region10: #{tpu_custom_call.1} parent=1 // pred_check
      _
    $region11: #{tpu_custom_call.1} parent=1 // pred_check_branch
      %16 = sbr.rel (0) target = $region13
    $region12: #{tpu_custom_call.1} parent=1 // pred_region
      _
    $region13: #{tpu_custom_call.1} parent=1 // pred_fallthru
      _
    // Predicated region
    $region14: #{tpu_custom_call.1} parent=1 // pred_check
      _
    $region15: #{tpu_custom_call.1} parent=1 // pred_check_branch
      %18 = sbr.rel (0) target = $region17
    $region16: #{tpu_custom_call.1} parent=1 // pred_region
      _
    $region17: #{tpu_custom_call.1} parent=1 // pred_fallthru
      _
    // Predicated region
    $region18: #{tpu_custom_call.1} parent=1 // pred_check
      _
    $region19: #{tpu_custom_call.1} parent=1 // pred_check_branch
      %20 = sbr.rel (0) target = $region21
    $region20: #{tpu_custom_call.1} parent=1 // pred_region
      _
    $region21: #{tpu_custom_call.1} parent=1 // pred_fallthru
      _
    %v22 = vld [vmem:[%s0] sm:$0xf]
    %v23 = vld [vmem:[%s0 + $0x8] sm:$0xf]
    %v24 = vld [vmem:[%s0 + $0x10] sm:$0xf]
    %v25 = vld [vmem:[%s0 + $0x18] sm:$0xf]
    %v26 = vld [vmem:[%s0 + $0x20] sm:$0xf]
    %v27 = vld [vmem:[%s0 + $0x28] sm:$0xf]
    %v28 = vld [vmem:[%s0 + $0x30] sm:$0xf]
    %v29 = vld [vmem:[%s0 + $0x38] sm:$0xf]
    %v30 = vld [vmem:[%s0 + $0x40] sm:$0xf]
    %v31 = vld [vmem:[%s0 + $0x48] sm:$0xf]
    %v32 = vld [vmem:[%s0 + $0x50] sm:$0xf]
    %v33 = vld [vmem:[%s0 + $0x58] sm:$0xf]
    %v34 = vld [vmem:[%s0 + $0x60] sm:$0xf]
    %v35 = vld [vmem:[%s0 + $0x68] sm:$0xf]
    %v36 = vld [vmem:[%s0 + $0x70] sm:$0xf]
    %v37 = vld [vmem:[%s0 + $0x78] sm:$0xf]
    %v38 = vld [vmem:[%s1] sm:$0xf]
    %v39 = vld [vmem:[%s1 + $0x4] sm:$0xf]
    %v40 = vld [vmem:[%s1 + $0x8] sm:$0xf]
    %v41 = vld [vmem:[%s1 + $0xc] sm:$0xf]
    %v42 = vld [vmem:[%s1 + $0x10] sm:$0xf]
    %v43 = vld [vmem:[%s1 + $0x14] sm:$0xf]
    %v44 = vld [vmem:[%s1 + $0x18] sm:$0xf]
    %v45 = vld [vmem:[%s1 + $0x1c] sm:$0xf]
    %v46 = vld [vmem:[%s1 + $0x20] sm:$0xf]
    %v47 = vld [vmem:[%s1 + $0x24] sm:$0xf]
    %v48 = vld [vmem:[%s1 + $0x28] sm:$0xf]
    %v49 = vld [vmem:[%s1 + $0x2c] sm:$0xf]
    %v50 = vld [vmem:[%s0 + $0x4] sm:$0x1]
    %v51 = vld [vmem:[%s0 + $0xc] sm:$0x1]
    %v52 = vld [vmem:[%s0 + $0x14] sm:$0x1]
    %v53 = vld [vmem:[%s0 + $0x1c] sm:$0x1]
    %v54 = vld [vmem:[%s0 + $0x24] sm:$0x1]
    %v55 = vld [vmem:[%s0 + $0x2c] sm:$0x1]
    %v56 = vld [vmem:[%s0 + $0x34] sm:$0x1]
    %v57 = vld [vmem:[%s0 + $0x3c] sm:$0x1]
    %v58 = vld [vmem:[%s0 + $0x44] sm:$0x1]
    %v59 = vld [vmem:[%s0 + $0x4c] sm:$0x1]
    %v60 = vld [vmem:[%s0 + $0x54] sm:$0x1]
    %v61 = vld [vmem:[%s0 + $0x5c] sm:$0x1]
    %v62 = vld [vmem:[%s0 + $0x64] sm:$0x1]
    %v63 = vld [vmem:[%s0 + $0x6c] sm:$0x1]
    %v64 = vld [vmem:[%s0 + $0x74] sm:$0x1]
    %v65 = vld [vmem:[%s0 + $0x7c] sm:$0x1]
    %vm66 = vsmask.f32 3328
    %vm67 = vsmask.f32 7440
    %vm68 = vmor %vm66, %vm67
    %v70 = vshrl.u32 %v22, 16
    %v72 = vrot.slane %v70, 4
    %v73 = vshll.u32 %v22, 16
    %v75 = vrot.slane %v73, 5
    %v76 = vor.u32 %v72, %v75
    %v77 = vrot.slane %v76, 4
    %v79 = vshll.u32 %v50, 16
    %v81 = vrot.slane %v79, 5
    %v82 = vsel %vm68, %v77, %v81
    %v84 = vshrl.u32 %v23, 16
    %v86 = vrot.slane %v84, 4
    %v87 = vshll.u32 %v23, 16
    %v89 = vrot.slane %v87, 5
    %v90 = vor.u32 %v86, %v89
    %v91 = vrot.slane %v90, 4
    %v93 = vshll.u32 %v51, 16
    %v95 = vrot.slane %v93, 5
    %v96 = vsel %vm68, %v91, %v95
    %v98 = vshrl.u32 %v24, 16
    %v100 = vrot.slane %v98, 4
    %v101 = vshll.u32 %v24, 16
    %v103 = vrot.slane %v101, 5
    %v104 = vor.u32 %v100, %v103
    %v105 = vrot.slane %v104, 4
    %v107 = vshll.u32 %v52, 16
    %v109 = vrot.slane %v107, 5
    %v110 = vsel %vm68, %v105, %v109
    %v112 = vshrl.u32 %v25, 16
    %v114 = vrot.slane %v112, 4
    %v115 = vshll.u32 %v25, 16
    %v117 = vrot.slane %v115, 5
    %v118 = vor.u32 %v114, %v117
    %v119 = vrot.slane %v118, 4
    %v121 = vshll.u32 %v53, 16
    %v123 = vrot.slane %v121, 5
    %v124 = vsel %vm68, %v119, %v123
    %v126 = vshrl.u32 %v26, 16
    %v128 = vrot.slane %v126, 4
    %v129 = vshll.u32 %v26, 16
    %v131 = vrot.slane %v129, 5
    %v132 = vor.u32 %v128, %v131
    %v133 = vrot.slane %v132, 4
    %v135 = vshll.u32 %v54, 16
    %v137 = vrot.slane %v135, 5
    %v138 = vsel %vm68, %v133, %v137
    %v140 = vshrl.u32 %v27, 16
    %v142 = vrot.slane %v140, 4
    %v143 = vshll.u32 %v27, 16
    %v145 = vrot.slane %v143, 5
    %v146 = vor.u32 %v142, %v145
    %v147 = vrot.slane %v146, 4
    %v149 = vshll.u32 %v55, 16
    %v151 = vrot.slane %v149, 5
    %v152 = vsel %vm68, %v147, %v151
    %v154 = vshrl.u32 %v28, 16
    %v156 = vrot.slane %v154, 4
    %v157 = vshll.u32 %v28, 16
    %v159 = vrot.slane %v157, 5
    %v160 = vor.u32 %v156, %v159
    %v161 = vrot.slane %v160, 4
    %v163 = vshll.u32 %v56, 16
    %v165 = vrot.slane %v163, 5
    %v166 = vsel %vm68, %v161, %v165
    %v168 = vshrl.u32 %v29, 16
    %v170 = vrot.slane %v168, 4
    %v171 = vshll.u32 %v29, 16
    %v173 = vrot.slane %v171, 5
    %v174 = vor.u32 %v170, %v173
    %v175 = vrot.slane %v174, 4
    %v177 = vshll.u32 %v57, 16
    %v179 = vrot.slane %v177, 5
    %v180 = vsel %vm68, %v175, %v179
    %v182 = vshrl.u32 %v30, 16
    %v184 = vrot.slane %v182, 4
    %v185 = vshll.u32 %v30, 16
    %v187 = vrot.slane %v185, 5
    %v188 = vor.u32 %v184, %v187
    %v189 = vrot.slane %v188, 4
    %v191 = vshll.u32 %v58, 16
    %v193 = vrot.slane %v191, 5
    %v194 = vsel %vm68, %v189, %v193
    %v196 = vshrl.u32 %v31, 16
    %v198 = vrot.slane %v196, 4
    %v199 = vshll.u32 %v31, 16
    %v201 = vrot.slane %v199, 5
    %v202 = vor.u32 %v198, %v201
    %v203 = vrot.slane %v202, 4
    %v205 = vshll.u32 %v59, 16
    %v207 = vrot.slane %v205, 5
    %v208 = vsel %vm68, %v203, %v207
    %v210 = vshrl.u32 %v32, 16
    %v212 = vrot.slane %v210, 4
    %v213 = vshll.u32 %v32, 16
    %v215 = vrot.slane %v213, 5
    %v216 = vor.u32 %v212, %v215
    %v217 = vrot.slane %v216, 4
    %v219 = vshll.u32 %v60, 16
    %v221 = vrot.slane %v219, 5
    %v222 = vsel %vm68, %v217, %v221
    %v224 = vshrl.u32 %v33, 16
    %v226 = vrot.slane %v224, 4
    %v227 = vshll.u32 %v33, 16
    %v229 = vrot.slane %v227, 5
    %v230 = vor.u32 %v226, %v229
    %v231 = vrot.slane %v230, 4
    %v233 = vshll.u32 %v61, 16
    %v235 = vrot.slane %v233, 5
    %v236 = vsel %vm68, %v231, %v235
    %v238 = vshrl.u32 %v34, 16
    %v240 = vrot.slane %v238, 4
    %v241 = vshll.u32 %v34, 16
    %v243 = vrot.slane %v241, 5
    %v244 = vor.u32 %v240, %v243
    %v245 = vrot.slane %v244, 4
    %v247 = vshll.u32 %v62, 16
    %v249 = vrot.slane %v247, 5
    %v250 = vsel %vm68, %v245, %v249
    %v252 = vshrl.u32 %v35, 16
    %v254 = vrot.slane %v252, 4
    %v255 = vshll.u32 %v35, 16
    %v257 = vrot.slane %v255, 5
    %v258 = vor.u32 %v254, %v257
    %v259 = vrot.slane %v258, 4
    %v261 = vshll.u32 %v63, 16
    %v263 = vrot.slane %v261, 5
    %v264 = vsel %vm68, %v259, %v263
    %v266 = vshrl.u32 %v36, 16
    %v268 = vrot.slane %v266, 4
    %v269 = vshll.u32 %v36, 16
    %v271 = vrot.slane %v269, 5
    %v272 = vor.u32 %v268, %v271
    %v273 = vrot.slane %v272, 4
    %v275 = vshll.u32 %v64, 16
    %v277 = vrot.slane %v275, 5
    %v278 = vsel %vm68, %v273, %v277
    %v280 = vshrl.u32 %v37, 16
    %v282 = vrot.slane %v280, 4
    %v283 = vshll.u32 %v37, 16
    %v285 = vrot.slane %v283, 5
    %v286 = vor.u32 %v282, %v285
    %v287 = vrot.slane %v286, 4
    %v289 = vshll.u32 %v65, 16
    %v291 = vrot.slane %v289, 5
    %v292 = vsel %vm68, %v287, %v291
    %s293 = scalar_lea.vmem %s1, 48
    %v294 = vld [vmem:[%s293] sm:$0xf]
    %v295 = vld [vmem:[%s293 + $0x4] sm:$0xf]
    %v296 = vld [vmem:[%s293 + $0x8] sm:$0xf]
    %v297 = vld [vmem:[%s293 + $0xc] sm:$0xf]
    %v298 = vld [vmem:[%s293 + $0x10] sm:$0xf]
    %v299 = vld [vmem:[%s293 + $0x14] sm:$0xf]
    %v300 = vld [vmem:[%s293 + $0x18] sm:$0xf]
    %v301 = vld [vmem:[%s293 + $0x1c] sm:$0xf]
    %v302 = vld [vmem:[%s293 + $0x20] sm:$0xf]
    %v303 = vld [vmem:[%s293 + $0x24] sm:$0xf]
    %v304 = vld [vmem:[%s293 + $0x28] sm:$0xf]
    %v305 = vld [vmem:[%s293 + $0x2c] sm:$0xf]
    %v306 = vunpack.c.l.b16 %v82
    %v307 = vunpack.c.l.b16 %v96
    %v308 = vunpack.c.l.b16 %v110
    %v309 = vunpack.c.l.b16 %v124
    %v310 = vunpack.c.l.b16 %v138
    %v311 = vunpack.c.l.b16 %v152
    %v312 = vunpack.c.l.b16 %v166
    %v313 = vunpack.c.l.b16 %v180
    %v314 = vunpack.c.l.b16 %v194
    %v315 = vunpack.c.l.b16 %v208
    %v316 = vunpack.c.l.b16 %v222
    %v317 = vunpack.c.l.b16 %v236
    %v318 = vunpack.c.l.b16 %v250
    %v319 = vunpack.c.l.b16 %v264
    %v320 = vunpack.c.l.b16 %v278
    %v321 = vunpack.c.l.b16 %v292
    %v322 = vpack.c.b16 %v307, %v306
    %v323 = vpack.c.b16 %v309, %v308
    %v324 = vpack.c.b16 %v311, %v310
    %v325 = vpack.c.b16 %v313, %v312
    %v326 = vpack.c.b16 %v315, %v314
    %v327 = vpack.c.b16 %v317, %v316
    %v328 = vpack.c.b16 %v319, %v318
    %v329 = vpack.c.b16 %v321, %v320
    %v342 = vunpack.c.l.b16 %v294
    %v343 = vunpack.c.l.b16 %v295
    %v344 = vunpack.c.l.b16 %v296
    %v345 = vunpack.c.l.b16 %v297
    %v346 = vunpack.c.l.b16 %v298
    %v347 = vunpack.c.l.b16 %v299
    %v348 = vunpack.c.l.b16 %v300
    %v349 = vunpack.c.l.b16 %v301
    %v350 = vunpack.c.l.b16 %v302
    %v351 = vunpack.c.l.b16 %v303
    %v352 = vunpack.c.l.b16 %v304
    %v353 = vunpack.c.l.b16 %v305
    %v354 = vpack.c.b16 %v343, %v342
    %v355 = vpack.c.b16 %v345, %v344
    %v356 = vpack.c.b16 %v347, %v346
    %v357 = vpack.c.b16 %v349, %v348
    %v358 = vpack.c.b16 %v351, %v350
    %v359 = vpack.c.b16 %v353, %v352
    %vm366 = vcmask 785408
    %v368 = vsel %vm366, %v322, 0
    %v371 = vsel %vm366, %v323, 0
    %v374 = vsel %vm366, %v324, 0
    %v377 = vsel %vm366, %v325, 0
    %v380 = vsel %vm366, %v326, 0
    %v383 = vsel %vm366, %v327, 0
    %v386 = vsel %vm366, %v328, 0
    %v389 = vsel %vm366, %v329, 0
    %391 = vmatpush.bf16.msra.mxu0 0
    %392 = vmatpush.bf16.msra.mxu0 0
    %393 = vmatpush.bf16.msra.mxu0 %v359
    %394 = vmatpush.bf16.msra.mxu0 %v358
    %395 = vmatpush.bf16.msra.mxu0 %v357
    %396 = vmatpush.bf16.msra.mxu0 %v356
    %397 = vmatpush.bf16.msra.mxu0 %v355
    %398 = vmatpush.bf16.msra.mxu0 %v354
    %399 = vmatmul.bf16.gmra.mxu0 %v368
    %v400 = vpop.f32.mrf.mxu0
    %v401 = vadd.f32 0.0, %v400
    %v402 = vpop.f32.mrf.mxu0
    %v403 = vadd.f32 0.0, %v402
    %404 = vmatmul.bf16.gmra.mxu0 %v371
    %v405 = vpop.f32.mrf.mxu0
    %v406 = vadd.f32 0.0, %v405
    %v407 = vpop.f32.mrf.mxu0
    %v408 = vadd.f32 0.0, %v407
    %409 = vmatmul.bf16.gmra.mxu0 %v374
    %v410 = vpop.f32.mrf.mxu0
    %v411 = vadd.f32 0.0, %v410
    %v412 = vpop.f32.mrf.mxu0
    %v413 = vadd.f32 0.0, %v412
    %414 = vmatmul.bf16.gmra.mxu0 %v377
    %v415 = vpop.f32.mrf.mxu0
    %v416 = vadd.f32 0.0, %v415
    %v417 = vpop.f32.mrf.mxu0
    %v418 = vadd.f32 0.0, %v417
    %419 = vmatmul.bf16.gmra.mxu0 %v380
    %v420 = vpop.f32.mrf.mxu0
    %v421 = vadd.f32 0.0, %v420
    %v422 = vpop.f32.mrf.mxu0
    %v423 = vadd.f32 0.0, %v422
    %424 = vmatmul.bf16.gmra.mxu0 %v383
    %v425 = vpop.f32.mrf.mxu0
    %v426 = vadd.f32 0.0, %v425
    %v427 = vpop.f32.mrf.mxu0
    %v428 = vadd.f32 0.0, %v427
    %429 = vmatmul.bf16.gmra.mxu0 %v386
    %v430 = vpop.f32.mrf.mxu0
    %v431 = vadd.f32 0.0, %v430
    %v432 = vpop.f32.mrf.mxu0
    %v433 = vadd.f32 0.0, %v432
    %434 = vmatmul.bf16.gmra.mxu0 %v389
    %v435 = vpop.f32.mrf.mxu0
    %v436 = vadd.f32 0.0, %v435
    %v437 = vpop.f32.mrf.mxu0
    %v438 = vadd.f32 0.0, %v437
    %439 = vdwg.mxu0
    %v456 = vunpack.c.l.b16 %v22
    %v457 = vunpack.c.l.b16 %v23
    %v458 = vunpack.c.l.b16 %v24
    %v459 = vunpack.c.l.b16 %v25
    %v460 = vunpack.c.l.b16 %v26
    %v461 = vunpack.c.l.b16 %v27
    %v462 = vunpack.c.l.b16 %v28
    %v463 = vunpack.c.l.b16 %v29
    %v464 = vunpack.c.l.b16 %v30
    %v465 = vunpack.c.l.b16 %v31
    %v466 = vunpack.c.l.b16 %v32
    %v467 = vunpack.c.l.b16 %v33
    %v468 = vunpack.c.l.b16 %v34
    %v469 = vunpack.c.l.b16 %v35
    %v470 = vunpack.c.l.b16 %v36
    %v471 = vunpack.c.l.b16 %v37
    %v472 = vpack.c.b16 %v457, %v456
    %v473 = vpack.c.b16 %v459, %v458
    %v474 = vpack.c.b16 %v461, %v460
    %v475 = vpack.c.b16 %v463, %v462
    %v476 = vpack.c.b16 %v465, %v464
    %v477 = vpack.c.b16 %v467, %v466
    %v478 = vpack.c.b16 %v469, %v468
    %v479 = vpack.c.b16 %v471, %v470
    %v492 = vunpack.c.l.b16 %v38
    %v493 = vunpack.c.l.b16 %v39
    %v494 = vunpack.c.l.b16 %v40
    %v495 = vunpack.c.l.b16 %v41
    %v496 = vunpack.c.l.b16 %v42
    %v497 = vunpack.c.l.b16 %v43
    %v498 = vunpack.c.l.b16 %v44
    %v499 = vunpack.c.l.b16 %v45
    %v500 = vunpack.c.l.b16 %v46
    %v501 = vunpack.c.l.b16 %v47
    %v502 = vunpack.c.l.b16 %v48
    %v503 = vunpack.c.l.b16 %v49
    %v504 = vpack.c.b16 %v493, %v492
    %v505 = vpack.c.b16 %v495, %v494
    %v506 = vpack.c.b16 %v497, %v496
    %v507 = vpack.c.b16 %v499, %v498
    %v508 = vpack.c.b16 %v501, %v500
    %v509 = vpack.c.b16 %v503, %v502
    %v517 = vsel %vm366, %v472, 0
    %v520 = vsel %vm366, %v473, 0
    %v523 = vsel %vm366, %v474, 0
    %v526 = vsel %vm366, %v475, 0
    %v529 = vsel %vm366, %v476, 0
    %v532 = vsel %vm366, %v477, 0
    %v535 = vsel %vm366, %v478, 0
    %v538 = vsel %vm366, %v479, 0
    %540 = vmatpush.bf16.msra.mxu0 0
    %541 = vmatpush.bf16.msra.mxu0 0
    %542 = vmatpush.bf16.msra.mxu0 %v509
    %543 = vmatpush.bf16.msra.mxu0 %v508
    %544 = vmatpush.bf16.msra.mxu0 %v507
    %545 = vmatpush.bf16.msra.mxu0 %v506
    %546 = vmatpush.bf16.msra.mxu0 %v505
    %547 = vmatpush.bf16.msra.mxu0 %v504
    %548 = vmatmul.bf16.gmra.mxu0 %v517
    %v549 = vpop.f32.mrf.mxu0
    %v550 = vadd.f32 %v401, %v549
    %v551 = vpop.f32.mrf.mxu0
    %v552 = vadd.f32 %v403, %v551
    %553 = vmatmul.bf16.gmra.mxu0 %v520
    %v554 = vpop.f32.mrf.mxu0
    %v555 = vadd.f32 %v406, %v554
    %v556 = vpop.f32.mrf.mxu0
    %v557 = vadd.f32 %v408, %v556
    %558 = vmatmul.bf16.gmra.mxu0 %v523
    %v559 = vpop.f32.mrf.mxu0
    %v560 = vadd.f32 %v411, %v559
    %v561 = vpop.f32.mrf.mxu0
    %v562 = vadd.f32 %v413, %v561
    %563 = vmatmul.bf16.gmra.mxu0 %v526
    %v564 = vpop.f32.mrf.mxu0
    %v565 = vadd.f32 %v416, %v564
    %v566 = vpop.f32.mrf.mxu0
    %v567 = vadd.f32 %v418, %v566
    %568 = vmatmul.bf16.gmra.mxu0 %v529
    %v569 = vpop.f32.mrf.mxu0
    %v570 = vadd.f32 %v421, %v569
    %v571 = vpop.f32.mrf.mxu0
    %v572 = vadd.f32 %v423, %v571
    %573 = vmatmul.bf16.gmra.mxu0 %v532
    %v574 = vpop.f32.mrf.mxu0
    %v575 = vadd.f32 %v426, %v574
    %v576 = vpop.f32.mrf.mxu0
    %v577 = vadd.f32 %v428, %v576
    %578 = vmatmul.bf16.gmra.mxu0 %v535
    %v579 = vpop.f32.mrf.mxu0
    %v580 = vadd.f32 %v431, %v579
    %v581 = vpop.f32.mrf.mxu0
    %v582 = vadd.f32 %v433, %v581
    %583 = vmatmul.bf16.gmra.mxu0 %v538
    %v584 = vpop.f32.mrf.mxu0
    %v585 = vadd.f32 %v436, %v584
    %v586 = vpop.f32.mrf.mxu0
    %v587 = vadd.f32 %v438, %v586
    %588 = vdwg.mxu0
    %v589 = vld [vmem:[%s0] sm:$0xe]
    %v590 = vld [vmem:[%s0 + $0x8] sm:$0xe]
    %v591 = vld [vmem:[%s0 + $0x10] sm:$0xe]
    %v592 = vld [vmem:[%s0 + $0x18] sm:$0xe]
    %v593 = vld [vmem:[%s0 + $0x20] sm:$0xe]
    %v594 = vld [vmem:[%s0 + $0x28] sm:$0xe]
    %v595 = vld [vmem:[%s0 + $0x30] sm:$0xe]
    %v596 = vld [vmem:[%s0 + $0x38] sm:$0xe]
    %v597 = vld [vmem:[%s0 + $0x40] sm:$0xe]
    %v598 = vld [vmem:[%s0 + $0x48] sm:$0xe]
    %v599 = vld [vmem:[%s0 + $0x50] sm:$0xe]
    %v600 = vld [vmem:[%s0 + $0x58] sm:$0xe]
    %v601 = vld [vmem:[%s0 + $0x60] sm:$0xe]
    %v602 = vld [vmem:[%s0 + $0x68] sm:$0xe]
    %v603 = vld [vmem:[%s0 + $0x70] sm:$0xe]
    %v604 = vld [vmem:[%s0 + $0x78] sm:$0xe]
    %vm637 = vcmask 1042432
    %vm638 = vcmask 1046532
    %vm639 = vmor %vm637, %vm638
    %v640 = vrot.slane %v589, 5
    %v641 = vrot.slane %v640, 4
    %v642 = vrot.slane %v50, 5
    %v643 = vsel %vm639, %v641, %v642
    %v644 = vrot.slane %v590, 5
    %v645 = vrot.slane %v644, 4
    %v646 = vrot.slane %v51, 5
    %v647 = vsel %vm639, %v645, %v646
    %v648 = vrot.slane %v591, 5
    %v649 = vrot.slane %v648, 4
    %v650 = vrot.slane %v52, 5
    %v651 = vsel %vm639, %v649, %v650
    %v652 = vrot.slane %v592, 5
    %v653 = vrot.slane %v652, 4
    %v654 = vrot.slane %v53, 5
    %v655 = vsel %vm639, %v653, %v654
    %v656 = vrot.slane %v593, 5
    %v657 = vrot.slane %v656, 4
    %v658 = vrot.slane %v54, 5
    %v659 = vsel %vm639, %v657, %v658
    %v660 = vrot.slane %v594, 5
    %v661 = vrot.slane %v660, 4
    %v662 = vrot.slane %v55, 5
    %v663 = vsel %vm639, %v661, %v662
    %v664 = vrot.slane %v595, 5
    %v665 = vrot.slane %v664, 4
    %v666 = vrot.slane %v56, 5
    %v667 = vsel %vm639, %v665, %v666
    %v668 = vrot.slane %v596, 5
    %v669 = vrot.slane %v668, 4
    %v670 = vrot.slane %v57, 5
    %v671 = vsel %vm639, %v669, %v670
    %v672 = vrot.slane %v597, 5
    %v673 = vrot.slane %v672, 4
    %v674 = vrot.slane %v58, 5
    %v675 = vsel %vm639, %v673, %v674
    %v676 = vrot.slane %v598, 5
    %v677 = vrot.slane %v676, 4
    %v678 = vrot.slane %v59, 5
    %v679 = vsel %vm639, %v677, %v678
    %v680 = vrot.slane %v599, 5
    %v681 = vrot.slane %v680, 4
    %v682 = vrot.slane %v60, 5
    %v683 = vsel %vm639, %v681, %v682
    %v684 = vrot.slane %v600, 5
    %v685 = vrot.slane %v684, 4
    %v686 = vrot.slane %v61, 5
    %v687 = vsel %vm639, %v685, %v686
    %v688 = vrot.slane %v601, 5
    %v689 = vrot.slane %v688, 4
    %v690 = vrot.slane %v62, 5
    %v691 = vsel %vm639, %v689, %v690
    %v692 = vrot.slane %v602, 5
    %v693 = vrot.slane %v692, 4
    %v694 = vrot.slane %v63, 5
    %v695 = vsel %vm639, %v693, %v694
    %v696 = vrot.slane %v603, 5
    %v697 = vrot.slane %v696, 4
    %v698 = vrot.slane %v64, 5
    %v699 = vsel %vm639, %v697, %v698
    %v700 = vrot.slane %v604, 5
    %v701 = vrot.slane %v700, 4
    %v702 = vrot.slane %v65, 5
    %v703 = vsel %vm639, %v701, %v702
    %s704 = scalar_lea.vmem %s1, 96
    %v705 = vld [vmem:[%s704] sm:$0xf]
    %v706 = vld [vmem:[%s704 + $0x4] sm:$0xf]
    %v707 = vld [vmem:[%s704 + $0x8] sm:$0xf]
    %v708 = vld [vmem:[%s704 + $0xc] sm:$0xf]
    %v709 = vld [vmem:[%s704 + $0x10] sm:$0xf]
    %v710 = vld [vmem:[%s704 + $0x14] sm:$0xf]
    %v711 = vld [vmem:[%s704 + $0x18] sm:$0xf]
    %v712 = vld [vmem:[%s704 + $0x1c] sm:$0xf]
    %v713 = vld [vmem:[%s704 + $0x20] sm:$0xf]
    %v714 = vld [vmem:[%s704 + $0x24] sm:$0xf]
    %v715 = vld [vmem:[%s704 + $0x28] sm:$0xf]
    %v716 = vld [vmem:[%s704 + $0x2c] sm:$0xf]
    %v717 = vunpack.c.l.b16 %v643
    %v718 = vunpack.c.l.b16 %v647
    %v719 = vunpack.c.l.b16 %v651
    %v720 = vunpack.c.l.b16 %v655
    %v721 = vunpack.c.l.b16 %v659
    %v722 = vunpack.c.l.b16 %v663
    %v723 = vunpack.c.l.b16 %v667
    %v724 = vunpack.c.l.b16 %v671
    %v725 = vunpack.c.l.b16 %v675
    %v726 = vunpack.c.l.b16 %v679
    %v727 = vunpack.c.l.b16 %v683
    %v728 = vunpack.c.l.b16 %v687
    %v729 = vunpack.c.l.b16 %v691
    %v730 = vunpack.c.l.b16 %v695
    %v731 = vunpack.c.l.b16 %v699
    %v732 = vunpack.c.l.b16 %v703
    %v733 = vpack.c.b16 %v718, %v717
    %v734 = vpack.c.b16 %v720, %v719
    %v735 = vpack.c.b16 %v722, %v721
    %v736 = vpack.c.b16 %v724, %v723
    %v737 = vpack.c.b16 %v726, %v725
    %v738 = vpack.c.b16 %v728, %v727
    %v739 = vpack.c.b16 %v730, %v729
    %v740 = vpack.c.b16 %v732, %v731
    %v753 = vunpack.c.l.b16 %v705
    %v754 = vunpack.c.l.b16 %v706
    %v755 = vunpack.c.l.b16 %v707
    %v756 = vunpack.c.l.b16 %v708
    %v757 = vunpack.c.l.b16 %v709
    %v758 = vunpack.c.l.b16 %v710
    %v759 = vunpack.c.l.b16 %v711
    %v760 = vunpack.c.l.b16 %v712
    %v761 = vunpack.c.l.b16 %v713
    %v762 = vunpack.c.l.b16 %v714
    %v763 = vunpack.c.l.b16 %v715
    %v764 = vunpack.c.l.b16 %v716
    %v765 = vpack.c.b16 %v754, %v753
    %v766 = vpack.c.b16 %v756, %v755
    %v767 = vpack.c.b16 %v758, %v757
    %v768 = vpack.c.b16 %v760, %v759
    %v769 = vpack.c.b16 %v762, %v761
    %v770 = vpack.c.b16 %v764, %v763
    %v778 = vsel %vm366, %v733, 0
    %v781 = vsel %vm366, %v734, 0
    %v784 = vsel %vm366, %v735, 0
    %v787 = vsel %vm366, %v736, 0
    %v790 = vsel %vm366, %v737, 0
    %v793 = vsel %vm366, %v738, 0
    %v796 = vsel %vm366, %v739, 0
    %v799 = vsel %vm366, %v740, 0
    %801 = vmatpush.bf16.msra.mxu0 0
    %802 = vmatpush.bf16.msra.mxu0 0
    %803 = vmatpush.bf16.msra.mxu0 %v770
    %804 = vmatpush.bf16.msra.mxu0 %v769
    %805 = vmatpush.bf16.msra.mxu0 %v768
    %806 = vmatpush.bf16.msra.mxu0 %v767
    %807 = vmatpush.bf16.msra.mxu0 %v766
    %808 = vmatpush.bf16.msra.mxu0 %v765
    %809 = vmatmul.bf16.gmra.mxu0 %v778
    %v810 = vpop.f32.mrf.mxu0
    %v811 = vadd.f32 0.0, %v810
    %v812 = vpop.f32.mrf.mxu0
    %v813 = vadd.f32 0.0, %v812
    %814 = vmatmul.bf16.gmra.mxu0 %v781
    %v815 = vpop.f32.mrf.mxu0
    %v816 = vadd.f32 0.0, %v815
    %v817 = vpop.f32.mrf.mxu0
    %v818 = vadd.f32 0.0, %v817
    %819 = vmatmul.bf16.gmra.mxu0 %v784
    %v820 = vpop.f32.mrf.mxu0
    %v821 = vadd.f32 0.0, %v820
    %v822 = vpop.f32.mrf.mxu0
    %v823 = vadd.f32 0.0, %v822
    %824 = vmatmul.bf16.gmra.mxu0 %v787
    %v825 = vpop.f32.mrf.mxu0
    %v826 = vadd.f32 0.0, %v825
    %v827 = vpop.f32.mrf.mxu0
    %v828 = vadd.f32 0.0, %v827
    %829 = vmatmul.bf16.gmra.mxu0 %v790
    %v830 = vpop.f32.mrf.mxu0
    %v831 = vadd.f32 0.0, %v830
    %v832 = vpop.f32.mrf.mxu0
    %v833 = vadd.f32 0.0, %v832
    %834 = vmatmul.bf16.gmra.mxu0 %v793
    %v835 = vpop.f32.mrf.mxu0
    %v836 = vadd.f32 0.0, %v835
    %v837 = vpop.f32.mrf.mxu0
    %v838 = vadd.f32 0.0, %v837
    %839 = vmatmul.bf16.gmra.mxu0 %v796
    %v840 = vpop.f32.mrf.mxu0
    %v841 = vadd.f32 0.0, %v840
    %v842 = vpop.f32.mrf.mxu0
    %v843 = vadd.f32 0.0, %v842
    %844 = vmatmul.bf16.gmra.mxu0 %v799
    %v845 = vpop.f32.mrf.mxu0
    %v846 = vadd.f32 0.0, %v845
    %v847 = vpop.f32.mrf.mxu0
    %v848 = vadd.f32 0.0, %v847
    %849 = vdwg.mxu0
    %v850 = vadd.f32 %v550, %v811
    %v851 = vadd.f32 %v552, %v813
    %v852 = vadd.f32 %v555, %v816
    %v853 = vadd.f32 %v557, %v818
    %v854 = vadd.f32 %v560, %v821
    %v855 = vadd.f32 %v562, %v823
    %v856 = vadd.f32 %v565, %v826
    %v857 = vadd.f32 %v567, %v828
    %v858 = vadd.f32 %v570, %v831
    %v859 = vadd.f32 %v572, %v833
    %v860 = vadd.f32 %v575, %v836
    %v861 = vadd.f32 %v577, %v838
    %v862 = vadd.f32 %v580, %v841
    %v863 = vadd.f32 %v582, %v843
    %v864 = vadd.f32 %v585, %v846
    %v865 = vadd.f32 %v587, %v848
    %v866 = vld [vmem:[%s2] sm:$0x1]
    %v868 = vperm.slane %v866, 0
    %v870 = vadd.f32 %v850, %v868
    %v871 = vadd.f32 %v851, %v868
    %v872 = vadd.f32 %v852, %v868
    %v873 = vadd.f32 %v853, %v868
    %v874 = vadd.f32 %v854, %v868
    %v875 = vadd.f32 %v855, %v868
    %v876 = vadd.f32 %v856, %v868
    %v877 = vadd.f32 %v857, %v868
    %v878 = vadd.f32 %v858, %v868
    %v879 = vadd.f32 %v859, %v868
    %v880 = vadd.f32 %v860, %v868
    %v881 = vadd.f32 %v861, %v868
    %v882 = vadd.f32 %v862, %v868
    %v883 = vadd.f32 %v863, %v868
    %v884 = vadd.f32 %v864, %v868
    %v885 = vadd.f32 %v865, %v868
    %v886 = vmax.f32 %v870, 0.0
    %v887 = vmax.f32 %v871, 0.0
    %v888 = vmax.f32 %v872, 0.0
    %v889 = vmax.f32 %v873, 0.0
    %v890 = vmax.f32 %v874, 0.0
    %v891 = vmax.f32 %v875, 0.0
    %v892 = vmax.f32 %v876, 0.0
    %v893 = vmax.f32 %v877, 0.0
    %v894 = vmax.f32 %v878, 0.0
    %v895 = vmax.f32 %v879, 0.0
    %v896 = vmax.f32 %v880, 0.0
    %v897 = vmax.f32 %v881, 0.0
    %v898 = vmax.f32 %v882, 0.0
    %v899 = vmax.f32 %v883, 0.0
    %v900 = vmax.f32 %v884, 0.0
    %v901 = vmax.f32 %v885, 0.0
    %v902 = vpack.c.bf16 %v887, %v886
    %v903 = vpack.c.bf16 %v889, %v888
    %v904 = vpack.c.bf16 %v891, %v890
    %v905 = vpack.c.bf16 %v893, %v892
    %v906 = vpack.c.bf16 %v895, %v894
    %v907 = vpack.c.bf16 %v897, %v896
    %v908 = vpack.c.bf16 %v899, %v898
    %v909 = vpack.c.bf16 %v901, %v900
    %v910 = vld [vmem:[%s3] sm:$0xf]
    %v911 = vld [vmem:[%s3 + $0x4] sm:$0xf]
    %v912 = vld [vmem:[%s3 + $0x8] sm:$0xf]
    %v913 = vld [vmem:[%s3 + $0xc] sm:$0xf]
    %v914 = vld [vmem:[%s4] sm:$0x1]
    %v916 = vperm.slane %v914, 0
    %v922 = vunpack.c.l.b16 %v910
    %v923 = vunpack.c.l.b16 %v911
    %v924 = vunpack.c.l.b16 %v912
    %v925 = vunpack.c.l.b16 %v913
    %v926 = vpack.c.b16 %v923, %v922
    %v927 = vpack.c.b16 %v925, %v924
    %vm930 = vcmask 261120
    %v932 = vsel %vm930, %v902, 0
    %v935 = vsel %vm930, %v903, 0
    %v938 = vsel %vm930, %v904, 0
    %v941 = vsel %vm930, %v905, 0
    %v944 = vsel %vm930, %v906, 0
    %v947 = vsel %vm930, %v907, 0
    %v950 = vsel %vm930, %v908, 0
    %v953 = vsel %vm930, %v909, 0
    %955 = vmatpush.bf16.msra.mxu0 0
    %956 = vmatpush.bf16.msra.mxu0 0
    %957 = vmatpush.bf16.msra.mxu0 0
    %958 = vmatpush.bf16.msra.mxu0 0
    %959 = vmatpush.bf16.msra.mxu0 0
    %960 = vmatpush.bf16.msra.mxu0 0
    %961 = vmatpush.bf16.msra.mxu0 %v927
    %962 = vmatpush.bf16.msra.mxu0 %v926
    %963 = vmatmul.bf16.gmra.mxu0 %v932
    %v964 = vpop.f32.mrf.mxu0
    %v965 = vadd.f32 %v916, %v964
    %v966 = vpop.f32.mrf.mxu0
    %v967 = vadd.f32 %v916, %v966
    %968 = vmatmul.bf16.gmra.mxu0 %v935
    %v969 = vpop.f32.mrf.mxu0
    %v970 = vadd.f32 %v916, %v969
    %v971 = vpop.f32.mrf.mxu0
    %v972 = vadd.f32 %v916, %v971
    %973 = vmatmul.bf16.gmra.mxu0 %v938
    %v974 = vpop.f32.mrf.mxu0
    %v975 = vadd.f32 %v916, %v974
    %v976 = vpop.f32.mrf.mxu0
    %v977 = vadd.f32 %v916, %v976
    %978 = vmatmul.bf16.gmra.mxu0 %v941
    %v979 = vpop.f32.mrf.mxu0
    %v980 = vadd.f32 %v916, %v979
    %v981 = vpop.f32.mrf.mxu0
    %v982 = vadd.f32 %v916, %v981
    %983 = vmatmul.bf16.gmra.mxu0 %v944
    %v984 = vpop.f32.mrf.mxu0
    %v985 = vadd.f32 %v916, %v984
    %v986 = vpop.f32.mrf.mxu0
    %v987 = vadd.f32 %v916, %v986
    %988 = vmatmul.bf16.gmra.mxu0 %v947
    %v989 = vpop.f32.mrf.mxu0
    %v990 = vadd.f32 %v916, %v989
    %v991 = vpop.f32.mrf.mxu0
    %v992 = vadd.f32 %v916, %v991
    %993 = vmatmul.bf16.gmra.mxu0 %v950
    %v994 = vpop.f32.mrf.mxu0
    %v995 = vadd.f32 %v916, %v994
    %v996 = vpop.f32.mrf.mxu0
    %v997 = vadd.f32 %v916, %v996
    %998 = vmatmul.bf16.gmra.mxu0 %v953
    %v999 = vpop.f32.mrf.mxu0
    %v1000 = vadd.f32 %v916, %v999
    %v1001 = vpop.f32.mrf.mxu0
    %v1002 = vadd.f32 %v916, %v1001
    %1003 = vdwg.mxu0
    %v1004 = vlaneseq
    %v1005 = vand.u32 %v1004, 127
    %vm1006 = vcmp.ge.s32.totalorder %v1005, 54
    %vm1007 = vcmp.lt.s32.totalorder %v1005, 63
    %vm1008 = vmand %vm1006, %vm1007
    %v1009 = vxor.u32 %v965, 2147483648
    %v1010 = vxor.u32 %v967, 2147483648
    %v1011 = vxor.u32 %v970, 2147483648
    %v1012 = vxor.u32 %v972, 2147483648
    %v1013 = vxor.u32 %v975, 2147483648
    %v1014 = vxor.u32 %v977, 2147483648
    %v1015 = vxor.u32 %v980, 2147483648
    %v1016 = vxor.u32 %v982, 2147483648
    %v1017 = vxor.u32 %v985, 2147483648
    %v1018 = vxor.u32 %v987, 2147483648
    %v1019 = vxor.u32 %v990, 2147483648
    %v1020 = vxor.u32 %v992, 2147483648
    %v1021 = vxor.u32 %v995, 2147483648
    %v1022 = vxor.u32 %v997, 2147483648
    %v1023 = vxor.u32 %v1000, 2147483648
    %v1024 = vxor.u32 %v1002, 2147483648
    %v1025 = vmul.f32 %v1009, 1.442695
    %v1026 = vpow.pop %v1025
    %v1027 = vmul.f32 %v1010, 1.442695
    %v1028 = vpow.pop %v1027
    %v1029 = vmul.f32 %v1011, 1.442695
    %v1030 = vpow.pop %v1029
    %v1031 = vmul.f32 %v1012, 1.442695
    %v1032 = vpow.pop %v1031
    %v1033 = vmul.f32 %v1013, 1.442695
    %v1034 = vpow.pop %v1033
    %v1035 = vmul.f32 %v1014, 1.442695
    %v1036 = vpow.pop %v1035
    %v1037 = vmul.f32 %v1015, 1.442695
    %v1038 = vpow.pop %v1037
    %v1039 = vmul.f32 %v1016, 1.442695
    %v1040 = vpow.pop %v1039
    %v1041 = vmul.f32 %v1017, 1.442695
    %v1042 = vpow.pop %v1041
    %v1043 = vmul.f32 %v1018, 1.442695
    %v1044 = vpow.pop %v1043
    %v1045 = vmul.f32 %v1019, 1.442695
    %v1046 = vpow.pop %v1045
    %v1047 = vmul.f32 %v1020, 1.442695
    %v1048 = vpow.pop %v1047
    %v1049 = vmul.f32 %v1021, 1.442695
    %v1050 = vpow.pop %v1049
    %v1051 = vmul.f32 %v1022, 1.442695
    %v1052 = vpow.pop %v1051
    %v1053 = vmul.f32 %v1023, 1.442695
    %v1054 = vpow.pop %v1053
    %v1055 = vmul.f32 %v1024, 1.442695
    %v1056 = vpow.pop %v1055
    %v1057 = vadd.f32 %v1026, 1.0
    %v1058 = vadd.f32 %v1028, 1.0
    %v1059 = vadd.f32 %v1030, 1.0
    %v1060 = vadd.f32 %v1032, 1.0
    %v1061 = vadd.f32 %v1034, 1.0
    %v1062 = vadd.f32 %v1036, 1.0
    %v1063 = vadd.f32 %v1038, 1.0
    %v1064 = vadd.f32 %v1040, 1.0
    %v1065 = vadd.f32 %v1042, 1.0
    %v1066 = vadd.f32 %v1044, 1.0
    %v1067 = vadd.f32 %v1046, 1.0
    %v1068 = vadd.f32 %v1048, 1.0
    %v1069 = vadd.f32 %v1050, 1.0
    %v1070 = vadd.f32 %v1052, 1.0
    %v1071 = vadd.f32 %v1054, 1.0
    %v1072 = vadd.f32 %v1056, 1.0
    %v1073 = vrcp.pop %v1057
    %v1074 = vmul.f32 %v1057, %v1073
    %v1075 = vsub.f32 1.0, %v1074
    %v1076 = vmul.f32 %v1073, %v1075
    %v1077 = vadd.f32 %v1073, %v1076
    %vm1078 = vweird.f32 %v1057
    %vm1079 = vweird.f32 %v1073
    %vm1080 = vmor %vm1078, %vm1079
    %v1081 = vsel %vm1080, %v1073, %v1077
    %v1082 = vand.u32 2147483647, %v1057
    %vm1083 = vcmp.eq.f32.partialorder %v1082, 8.507059e+37
    %v1084 = vand.u32 %v1057, 2147483648
    %v1085 = vor.u32 1.1754944e-38, %v1084
    %v1086 = vsel %vm1083, %v1085, %v1081
    %v1087 = vmul.f32 1.0, %v1086
    %v1088 = vrcp.pop %v1058
    %v1089 = vmul.f32 %v1058, %v1088
    %v1090 = vsub.f32 1.0, %v1089
    %v1091 = vmul.f32 %v1088, %v1090
    %v1092 = vadd.f32 %v1088, %v1091
    %vm1093 = vweird.f32 %v1058
    %vm1094 = vweird.f32 %v1088
    %vm1095 = vmor %vm1093, %vm1094
    %v1096 = vsel %vm1095, %v1088, %v1092
    %v1097 = vand.u32 2147483647, %v1058
    %vm1098 = vcmp.eq.f32.partialorder %v1097, 8.507059e+37
    %v1099 = vand.u32 %v1058, 2147483648
    %v1100 = vor.u32 1.1754944e-38, %v1099
    %v1101 = vsel %vm1098, %v1100, %v1096
    %v1102 = vmul.f32 1.0, %v1101
    %v1103 = vrcp.pop %v1059
    %v1104 = vmul.f32 %v1059, %v1103
    %v1105 = vsub.f32 1.0, %v1104
    %v1106 = vmul.f32 %v1103, %v1105
    %v1107 = vadd.f32 %v1103, %v1106
    %vm1108 = vweird.f32 %v1059
    %vm1109 = vweird.f32 %v1103
    %vm1110 = vmor %vm1108, %vm1109
    %v1111 = vsel %vm1110, %v1103, %v1107
    %v1112 = vand.u32 2147483647, %v1059
    %vm1113 = vcmp.eq.f32.partialorder %v1112, 8.507059e+37
    %v1114 = vand.u32 %v1059, 2147483648
    %v1115 = vor.u32 1.1754944e-38, %v1114
    %v1116 = vsel %vm1113, %v1115, %v1111
    %v1117 = vmul.f32 1.0, %v1116
    %v1118 = vrcp.pop %v1060
    %v1119 = vmul.f32 %v1060, %v1118
    %v1120 = vsub.f32 1.0, %v1119
    %v1121 = vmul.f32 %v1118, %v1120
    %v1122 = vadd.f32 %v1118, %v1121
    %vm1123 = vweird.f32 %v1060
    %vm1124 = vweird.f32 %v1118
    %vm1125 = vmor %vm1123, %vm1124
    %v1126 = vsel %vm1125, %v1118, %v1122
    %v1127 = vand.u32 2147483647, %v1060
    %vm1128 = vcmp.eq.f32.partialorder %v1127, 8.507059e+37
    %v1129 = vand.u32 %v1060, 2147483648
    %v1130 = vor.u32 1.1754944e-38, %v1129
    %v1131 = vsel %vm1128, %v1130, %v1126
    %v1132 = vmul.f32 1.0, %v1131
    %v1133 = vrcp.pop %v1061
    %v1134 = vmul.f32 %v1061, %v1133
    %v1135 = vsub.f32 1.0, %v1134
    %v1136 = vmul.f32 %v1133, %v1135
    %v1137 = vadd.f32 %v1133, %v1136
    %vm1138 = vweird.f32 %v1061
    %vm1139 = vweird.f32 %v1133
    %vm1140 = vmor %vm1138, %vm1139
    %v1141 = vsel %vm1140, %v1133, %v1137
    %v1142 = vand.u32 2147483647, %v1061
    %vm1143 = vcmp.eq.f32.partialorder %v1142, 8.507059e+37
    %v1144 = vand.u32 %v1061, 2147483648
    %v1145 = vor.u32 1.1754944e-38, %v1144
    %v1146 = vsel %vm1143, %v1145, %v1141
    %v1147 = vmul.f32 1.0, %v1146
    %v1148 = vrcp.pop %v1062
    %v1149 = vmul.f32 %v1062, %v1148
    %v1150 = vsub.f32 1.0, %v1149
    %v1151 = vmul.f32 %v1148, %v1150
    %v1152 = vadd.f32 %v1148, %v1151
    %vm1153 = vweird.f32 %v1062
    %vm1154 = vweird.f32 %v1148
    %vm1155 = vmor %vm1153, %vm1154
    %v1156 = vsel %vm1155, %v1148, %v1152
    %v1157 = vand.u32 2147483647, %v1062
    %vm1158 = vcmp.eq.f32.partialorder %v1157, 8.507059e+37
    %v1159 = vand.u32 %v1062, 2147483648
    %v1160 = vor.u32 1.1754944e-38, %v1159
    %v1161 = vsel %vm1158, %v1160, %v1156
    %v1162 = vmul.f32 1.0, %v1161
    %v1163 = vrcp.pop %v1063
    %v1164 = vmul.f32 %v1063, %v1163
    %v1165 = vsub.f32 1.0, %v1164
    %v1166 = vmul.f32 %v1163, %v1165
    %v1167 = vadd.f32 %v1163, %v1166
    %vm1168 = vweird.f32 %v1063
    %vm1169 = vweird.f32 %v1163
    %vm1170 = vmor %vm1168, %vm1169
    %v1171 = vsel %vm1170, %v1163, %v1167
    %v1172 = vand.u32 2147483647, %v1063
    %vm1173 = vcmp.eq.f32.partialorder %v1172, 8.507059e+37
    %v1174 = vand.u32 %v1063, 2147483648
    %v1175 = vor.u32 1.1754944e-38, %v1174
    %v1176 = vsel %vm1173, %v1175, %v1171
    %v1177 = vmul.f32 1.0, %v1176
    %v1178 = vrcp.pop %v1064
    %v1179 = vmul.f32 %v1064, %v1178
    %v1180 = vsub.f32 1.0, %v1179
    %v1181 = vmul.f32 %v1178, %v1180
    %v1182 = vadd.f32 %v1178, %v1181
    %vm1183 = vweird.f32 %v1064
    %vm1184 = vweird.f32 %v1178
    %vm1185 = vmor %vm1183, %vm1184
    %v1186 = vsel %vm1185, %v1178, %v1182
    %v1187 = vand.u32 2147483647, %v1064
    %vm1188 = vcmp.eq.f32.partialorder %v1187, 8.507059e+37
    %v1189 = vand.u32 %v1064, 2147483648
    %v1190 = vor.u32 1.1754944e-38, %v1189
    %v1191 = vsel %vm1188, %v1190, %v1186
    %v1192 = vmul.f32 1.0, %v1191
    %v1193 = vrcp.pop %v1065
    %v1194 = vmul.f32 %v1065, %v1193
    %v1195 = vsub.f32 1.0, %v1194
    %v1196 = vmul.f32 %v1193, %v1195
    %v1197 = vadd.f32 %v1193, %v1196
    %vm1198 = vweird.f32 %v1065
    %vm1199 = vweird.f32 %v1193
    %vm1200 = vmor %vm1198, %vm1199
    %v1201 = vsel %vm1200, %v1193, %v1197
    %v1202 = vand.u32 2147483647, %v1065
    %vm1203 = vcmp.eq.f32.partialorder %v1202, 8.507059e+37
    %v1204 = vand.u32 %v1065, 2147483648
    %v1205 = vor.u32 1.1754944e-38, %v1204
    %v1206 = vsel %vm1203, %v1205, %v1201
    %v1207 = vmul.f32 1.0, %v1206
    %v1208 = vrcp.pop %v1066
    %v1209 = vmul.f32 %v1066, %v1208
    %v1210 = vsub.f32 1.0, %v1209
    %v1211 = vmul.f32 %v1208, %v1210
    %v1212 = vadd.f32 %v1208, %v1211
    %vm1213 = vweird.f32 %v1066
    %vm1214 = vweird.f32 %v1208
    %vm1215 = vmor %vm1213, %vm1214
    %v1216 = vsel %vm1215, %v1208, %v1212
    %v1217 = vand.u32 2147483647, %v1066
    %vm1218 = vcmp.eq.f32.partialorder %v1217, 8.507059e+37
    %v1219 = vand.u32 %v1066, 2147483648
    %v1220 = vor.u32 1.1754944e-38, %v1219
    %v1221 = vsel %vm1218, %v1220, %v1216
    %v1222 = vmul.f32 1.0, %v1221
    %v1223 = vrcp.pop %v1067
    %v1224 = vmul.f32 %v1067, %v1223
    %v1225 = vsub.f32 1.0, %v1224
    %v1226 = vmul.f32 %v1223, %v1225
    %v1227 = vadd.f32 %v1223, %v1226
    %vm1228 = vweird.f32 %v1067
    %vm1229 = vweird.f32 %v1223
    %vm1230 = vmor %vm1228, %vm1229
    %v1231 = vsel %vm1230, %v1223, %v1227
    %v1232 = vand.u32 2147483647, %v1067
    %vm1233 = vcmp.eq.f32.partialorder %v1232, 8.507059e+37
    %v1234 = vand.u32 %v1067, 2147483648
    %v1235 = vor.u32 1.1754944e-38, %v1234
    %v1236 = vsel %vm1233, %v1235, %v1231
    %v1237 = vmul.f32 1.0, %v1236
    %v1238 = vrcp.pop %v1068
    %v1239 = vmul.f32 %v1068, %v1238
    %v1240 = vsub.f32 1.0, %v1239
    %v1241 = vmul.f32 %v1238, %v1240
    %v1242 = vadd.f32 %v1238, %v1241
    %vm1243 = vweird.f32 %v1068
    %vm1244 = vweird.f32 %v1238
    %vm1245 = vmor %vm1243, %vm1244
    %v1246 = vsel %vm1245, %v1238, %v1242
    %v1247 = vand.u32 2147483647, %v1068
    %vm1248 = vcmp.eq.f32.partialorder %v1247, 8.507059e+37
    %v1249 = vand.u32 %v1068, 2147483648
    %v1250 = vor.u32 1.1754944e-38, %v1249
    %v1251 = vsel %vm1248, %v1250, %v1246
    %v1252 = vmul.f32 1.0, %v1251
    %v1253 = vrcp.pop %v1069
    %v1254 = vmul.f32 %v1069, %v1253
    %v1255 = vsub.f32 1.0, %v1254
    %v1256 = vmul.f32 %v1253, %v1255
    %v1257 = vadd.f32 %v1253, %v1256
    %vm1258 = vweird.f32 %v1069
    %vm1259 = vweird.f32 %v1253
    %vm1260 = vmor %vm1258, %vm1259
    %v1261 = vsel %vm1260, %v1253, %v1257
    %v1262 = vand.u32 2147483647, %v1069
    %vm1263 = vcmp.eq.f32.partialorder %v1262, 8.507059e+37
    %v1264 = vand.u32 %v1069, 2147483648
    %v1265 = vor.u32 1.1754944e-38, %v1264
    %v1266 = vsel %vm1263, %v1265, %v1261
    %v1267 = vmul.f32 1.0, %v1266
    %v1268 = vrcp.pop %v1070
    %v1269 = vmul.f32 %v1070, %v1268
    %v1270 = vsub.f32 1.0, %v1269
    %v1271 = vmul.f32 %v1268, %v1270
    %v1272 = vadd.f32 %v1268, %v1271
    %vm1273 = vweird.f32 %v1070
    %vm1274 = vweird.f32 %v1268
    %vm1275 = vmor %vm1273, %vm1274
    %v1276 = vsel %vm1275, %v1268, %v1272
    %v1277 = vand.u32 2147483647, %v1070
    %vm1278 = vcmp.eq.f32.partialorder %v1277, 8.507059e+37
    %v1279 = vand.u32 %v1070, 2147483648
    %v1280 = vor.u32 1.1754944e-38, %v1279
    %v1281 = vsel %vm1278, %v1280, %v1276
    %v1282 = vmul.f32 1.0, %v1281
    %v1283 = vrcp.pop %v1071
    %v1284 = vmul.f32 %v1071, %v1283
    %v1285 = vsub.f32 1.0, %v1284
    %v1286 = vmul.f32 %v1283, %v1285
    %v1287 = vadd.f32 %v1283, %v1286
    %vm1288 = vweird.f32 %v1071
    %vm1289 = vweird.f32 %v1283
    %vm1290 = vmor %vm1288, %vm1289
    %v1291 = vsel %vm1290, %v1283, %v1287
    %v1292 = vand.u32 2147483647, %v1071
    %vm1293 = vcmp.eq.f32.partialorder %v1292, 8.507059e+37
    %v1294 = vand.u32 %v1071, 2147483648
    %v1295 = vor.u32 1.1754944e-38, %v1294
    %v1296 = vsel %vm1293, %v1295, %v1291
    %v1297 = vmul.f32 1.0, %v1296
    %v1298 = vrcp.pop %v1072
    %v1299 = vmul.f32 %v1072, %v1298
    %v1300 = vsub.f32 1.0, %v1299
    %v1301 = vmul.f32 %v1298, %v1300
    %v1302 = vadd.f32 %v1298, %v1301
    %vm1303 = vweird.f32 %v1072
    %vm1304 = vweird.f32 %v1298
    %vm1305 = vmor %vm1303, %vm1304
    %v1306 = vsel %vm1305, %v1298, %v1302
    %v1307 = vand.u32 2147483647, %v1072
    %vm1308 = vcmp.eq.f32.partialorder %v1307, 8.507059e+37
    %v1309 = vand.u32 %v1072, 2147483648
    %v1310 = vor.u32 1.1754944e-38, %v1309
    %v1311 = vsel %vm1308, %v1310, %v1306
    %v1312 = vmul.f32 1.0, %v1311
    %v1313 = vsel %vm1008, %v1087, %v965
    %v1314 = vsel %vm1008, %v1102, %v967
    %v1315 = vsel %vm1008, %v1117, %v970
    %v1316 = vsel %vm1008, %v1132, %v972
    %v1317 = vsel %vm1008, %v1147, %v975
    %v1318 = vsel %vm1008, %v1162, %v977
    %v1319 = vsel %vm1008, %v1177, %v980
    %v1320 = vsel %vm1008, %v1192, %v982
    %v1321 = vsel %vm1008, %v1207, %v985
    %v1322 = vsel %vm1008, %v1222, %v987
    %v1323 = vsel %vm1008, %v1237, %v990
    %v1324 = vsel %vm1008, %v1252, %v992
    %v1325 = vsel %vm1008, %v1267, %v995
    %v1326 = vsel %vm1008, %v1282, %v997
    %v1327 = vsel %vm1008, %v1297, %v1000
    %v1328 = vsel %vm1008, %v1312, %v1002
    %1329 = vst [vmem:[#allocation2] sm:$0xff] %v1313
    %1330 = vst [vmem:[#allocation2 + $0x8] sm:$0xff] %v1314
    %1331 = vst [vmem:[#allocation2 + $0x10] sm:$0xff] %v1315
    %1332 = vst [vmem:[#allocation2 + $0x18] sm:$0xff] %v1316
    %1333 = vst [vmem:[#allocation2 + $0x20] sm:$0xff] %v1317
    %1334 = vst [vmem:[#allocation2 + $0x28] sm:$0xff] %v1318
    %1335 = vst [vmem:[#allocation2 + $0x30] sm:$0xff] %v1319
    %1336 = vst [vmem:[#allocation2 + $0x38] sm:$0xff] %v1320
    %1337 = vst [vmem:[#allocation2 + $0x40] sm:$0xff] %v1321
    %1338 = vst [vmem:[#allocation2 + $0x48] sm:$0xff] %v1322
    %1339 = vst [vmem:[#allocation2 + $0x50] sm:$0xff] %v1323
    %1340 = vst [vmem:[#allocation2 + $0x58] sm:$0xff] %v1324
    %1341 = vst [vmem:[#allocation2 + $0x60] sm:$0xff] %v1325
    %1342 = vst [vmem:[#allocation2 + $0x68] sm:$0xff] %v1326
    %1343 = vst [vmem:[#allocation2 + $0x70] sm:$0xff] %v1327
    %1344 = vst [vmem:[#allocation2 + $0x78] sm:$0xff] %v1328
    // Predicated region
    $region22: #{tpu_custom_call.1} parent=1 // pred_check
      _
    $region23: #{tpu_custom_call.1} parent=1 // pred_check_branch
      %1346 = sbr.rel (0) target = $region25
    $region24: #{tpu_custom_call.1} parent=1 // pred_region
      %1348 = vsyncadd [#allocation3], 0
      %s1349 = sshll.u32 [#allocation2], 4
      %s1350 = int_to_ptr.vmem [resolvable:$true] %s1349
      %s1351 = sshll.u32 %s5, 4
      %s1352 = int_to_ptr.hbm [resolvable:$true] %s1351
      %1357 = dma.vmem_to_hbm [thread:$0]  %s1350, 2048, %s1352, [#allocation3], 128, 128, 8
    $region25: #{tpu_custom_call.1} parent=1 // pred_fallthru
      _
    // Predicated region
    $region26: #{tpu_custom_call.1} parent=1 // pred_check
      _
    $region27: #{tpu_custom_call.1} parent=1 // pred_check_branch
      %1359 = sbr.rel (0) target = $region29
    $region28: #{tpu_custom_call.1} parent=1 // pred_region
      %1361 = dma.done [#allocation3], 2048
    $region29: #{tpu_custom_call.1} parent=1 // pred_fallthru
      _
    %1362 = vsyncpa [#allocation3], 1

</llo_original>
